<compile_context>
chip_gen: v5e
topology: v5e:2x2
jax: 0.10.0
libtpu: 0.0.40
codegen_flags: <defaults>
</compile_context>

<pallas_src>
import functools

import jax
import jax.numpy as jnp
from jax import lax
from jax.experimental import pallas as pl
from jax.experimental.pallas import tpu as pltpu


def _round_up(x, m):
    return ((x + m - 1) // m) * m


def _pick_d_tile(D, H, W, Cp, budget_bytes=128 * 1024):
    """Largest divisor of D whose f32 accumulator tile (TD*H*W, Cp) fits budget."""
    best = 1
    for td in range(1, D + 1):
        if D % td == 0 and td * H * W * Cp * 4 <= budget_bytes:
            best = td
    return best


def _pick_row_tile(M, target=2048):
    """Row tile for the BN pass: multiple of 8 dividing M, close to target."""
    if M <= target:
        return M
    best = None
    for tr in range(8, target + 1, 8):
        if M % tr == 0:
            best = tr
    return best if best is not None else M


# ----------------------------------------------------------------------------
# Kernel 1: dilated 3x3x1 conv as a single folded matmul per D-tile, plus
#           per-batch-element channel sum / sum-of-squares (feeds training BN).
# ----------------------------------------------------------------------------
def _conv_stats_kernel(x_ref, w_ref, o_ref, sum_ref, sumsq_ref, *, D, H, dil, TD):
    # x_ref:     (1, D+2d, H+2d, W, Cin)  zero-padded input for one batch elem
    # w_ref:     (9*Cin, Cp)              taps flattened along the K dimension
    # o_ref:     (1, D, H, W, Cp)         conv output (channel-padded, lane-dense)
    # sum_ref:   (1, 1, Cp)               per-batch-elem channel sum
    # sumsq_ref: (1, 1, Cp)               per-batch-elem channel sum of squares
    W = x_ref.shape[3]
    Cin = x_ref.shape[4]
    Cp = w_ref.shape[-1]
    n_tiles = D // TD
    rows = TD * H * W

    sum_ref[...] = jnp.zeros_like(sum_ref)
    sumsq_ref[...] = jnp.zeros_like(sumsq_ref)
    w_mat = w_ref[...]                                    # (9*Cin, Cp), resident

    def body(t, carry):
        d0 = pl.multiple_of(t * TD, TD)
        # im2col: concatenate the 9 shifted slabs along channels -> K = 9*Cin,
        # replacing 9 tiny matmuls + VPU adds with a single MXU contraction.
        parts = []
        for kd in range(3):
            for kh in range(3):
                slab = x_ref[0, pl.ds(d0 + kd * dil, TD),
                             kh * dil:kh * dil + H, :, :]
                parts.append(slab.reshape(rows, Cin))
        lhs = jnp.concatenate(parts, axis=-1)             # (rows, 9*Cin)
        acc = jnp.dot(lhs, w_mat, preferred_element_type=jnp.float32)
        o_ref[0, pl.ds(d0, TD)] = acc.reshape(TD, H, W, Cp).astype(o_ref.dtype)
        sum_ref[...] += jnp.sum(acc, axis=0).reshape(1, 1, Cp)
        sumsq_ref[...] += jnp.sum(acc * acc, axis=0).reshape(1, 1, Cp)
        return carry

    lax.fori_loop(0, n_tiles, body, 0)


def _conv3x3x1_with_stats(x_ndhwc, w_flat, dil, Cp):
    N, D, H, W, Cin = x_ndhwc.shape
    pad = dil  # padding=(d, d, 0) with dilation d keeps D, H, W unchanged
    # TODO(synk): the D/H halo is still materialized with jnp.pad (one extra
    # HBM pass over the small Cin-wide input); in-kernel boundary masking
    # would remove it.
    x_pad = jnp.pad(x_ndhwc, ((0, 0), (pad, pad), (pad, pad), (0, 0), (0, 0)))
    Dp, Hp = D + 2 * pad, H + 2 * pad
    K9 = w_flat.shape[0]
    TD = _pick_d_tile(D, H, W, Cp)

    kernel = functools.partial(_conv_stats_kernel, D=D, H=H, dil=dil, TD=TD)
    out_shapes = (
        jax.ShapeDtypeStruct((N, D, H, W, Cp), jnp.float32),
        jax.ShapeDtypeStruct((N, 1, Cp), jnp.float32),   # per-n partial sums
        jax.ShapeDtypeStruct((N, 1, Cp), jnp.float32),   # per-n partial sumsq
    )
    conv_out, psum, psumsq = pl.pallas_call(
        kernel,
        out_shape=out_shapes,
        grid_spec=pltpu.PrefetchScalarGridSpec(
            num_scalar_prefetch=0,
            grid=(N,),
            in_specs=[
                pl.BlockSpec((1, Dp, Hp, W, Cin), lambda n: (n, 0, 0, 0, 0)),
                pl.BlockSpec((K9, Cp), lambda n: (0, 0)),
            ],
            out_specs=[
                pl.BlockSpec((1, D, H, W, Cp), lambda n: (n, 0, 0, 0, 0)),
                pl.BlockSpec((1, 1, Cp), lambda n: (n, 0, 0)),
                pl.BlockSpec((1, 1, Cp), lambda n: (n, 0, 0)),
            ],
        ),
        # Stats are per-n, so the grid axis is safely parallel (2 TCs on v7x).
        compiler_params=pltpu.CompilerParams(
            dimension_semantics=("parallel",)),
    )(x_pad, w_flat)
    return conv_out, psum, psumsq


# ----------------------------------------------------------------------------
# Kernel 2: fused BatchNorm affine transform (precomputed scale/shift) + ReLU.
#           Reads the lane-dense (TR, Cp) conv tile, writes the unpadded
#           (TR, Cout) result directly (no separate channel-slice pass).
# ----------------------------------------------------------------------------
def _bn_act_kernel(y_ref, scale_ref, shift_ref, o_ref):
    Cout = o_ref.shape[-1]
    y = y_ref[...] * scale_ref[...] + shift_ref[...]
    o_ref[...] = jnp.maximum(y[:, :Cout], 0.0).astype(o_ref.dtype)


def dconv_3x3x1_forward(x_ncdhw, w_taps, gamma, beta, *, dil=1, eps=1e-5):
    """Forward pass of DConv_3x3x1 with activation=ReLU.

    x_ncdhw: (N, Cin, D, H, W) -- PyTorch Conv3d layout.
    w_taps:  (3, 3, Cin, Cout) == torch weight (Cout, Cin, 3, 3, 1) permuted as
             w_taps[kd, kh, ci, co] = w_torch[co, ci, kd, kh, 0].
    """
    # TODO(synk): the module's `activation` argument is generic; ReLU is used here.
    x = jnp.transpose(x_ncdhw, (0, 2, 3, 4, 1)).astype(jnp.float32)  # -> NDHWC
    N, D, H, W, Cin = x.shape
    Cout = w_taps.shape[-1]
    Cp = _round_up(Cout, 128)                 # lane-dense channel dim for the matmul

    # Fold the 9 taps into one contraction; pad Cout to Cp lanes.
    w_flat = w_taps.reshape(9 * Cin, Cout).astype(jnp.float32)
    w_flat = jnp.pad(w_flat, ((0, 0), (0, Cp - Cout)))

    conv_out, psum, psumsq = _conv3x3x1_with_stats(x, w_flat, dil, Cp)

    # BatchNorm3d training mode: biased batch statistics over (N, D, H, W).
    count = N * D * H * W
    ch_sum = jnp.sum(psum[:, 0, :], axis=0)
    ch_sumsq = jnp.sum(psumsq[:, 0, :], axis=0)
    mean = ch_sum / count
    var = jnp.maximum(ch_sumsq / count - mean * mean, 0.0)
    gamma_p = jnp.pad(gamma.astype(jnp.float32), (0, Cp - Cout))
    beta_p = jnp.pad(beta.astype(jnp.float32), (0, Cp - Cout))
    scale = gamma_p * lax.rsqrt(var + eps)
    shift = beta_p - mean * scale

    # Fused BN + ReLU on the flat view; output is already channel-unpadded.
    M = N * D * H * W
    TR = _pick_row_tile(M)
    y2 = pl.pallas_call(
        _bn_act_kernel,
        out_shape=jax.ShapeDtypeStruct((M, Cout), jnp.float32),
        grid_spec=pltpu.PrefetchScalarGridSpec(
            num_scalar_prefetch=0,
            grid=(M // TR,),
            in_specs=[
                pl.BlockSpec((TR, Cp), lambda r: (r, 0)),
                pl.BlockSpec((1, Cp), lambda r: (0, 0)),
                pl.BlockSpec((1, Cp), lambda r: (0, 0)),
            ],
            out_specs=pl.BlockSpec((TR, Cout), lambda r: (r, 0)),
        ),
        compiler_params=pltpu.CompilerParams(
            dimension_semantics=("parallel",)),
    )(conv_out.reshape(M, Cp), scale.reshape(1, Cp), shift.reshape(1, Cp))

    y = y2.reshape(N, D, H, W, Cout)
    return jnp.transpose(y, (0, 4, 1, 2, 3))              # -> NCDHW


# ----------------------------------------------------------------------------
# Pure-JAX reference for verification.
# ----------------------------------------------------------------------------
def _reference(x_ncdhw, w_taps, gamma, beta, dil, eps=1e-5):
    w = w_taps[:, :, None, :, :]                          # (3, 3, 1, Cin, Cout) DHWIO
    x = jnp.transpose(x_ncdhw, (0, 2, 3, 4, 1))
    conv = lax.conv_general_dilated(
        x, w, window_strides=(1, 1, 1),
        padding=((dil, dil), (dil, dil), (0, 0)),
        rhs_dilation=(dil, dil, dil),
        dimension_numbers=("NDHWC", "DHWIO", "NDHWC"))
    mean = conv.mean(axis=(0, 1, 2, 3))
    var = conv.var(axis=(0, 1, 2, 3))                     # biased, BN training forward
    y = (conv - mean) / jnp.sqrt(var + eps) * gamma + beta
    y = jnp.maximum(y, 0.0)
    return jnp.transpose(y, (0, 4, 1, 2, 3))


if __name__ == "__main__":
    # Small shapes consistent with the module: N=2, Cin=4, Cout=8, D=H=W=8.
    N, Cin, Cout, D, H, W = 2, 4, 8, 8, 8, 8

    key = jax.random.PRNGKey(0)
    kx, kw = jax.random.split(key)
    x = jax.random.normal(kx, (N, Cin, D, H, W), jnp.float32)
    w_taps = 0.1 * jax.random.normal(kw, (3, 3, Cin, Cout), jnp.float32)
    gamma = jnp.ones((Cout,), jnp.float32)    # BatchNorm3d default weight init
    beta = jnp.zeros((Cout,), jnp.float32)    # BatchNorm3d default bias init

    for dil in (1, 2):                        # exercise the dilation parameter d
        out = dconv_3x3x1_forward(x, w_taps, gamma, beta, dil=dil)
        out = jax.block_until_ready(out)
        ref = _reference(x, w_taps, gamma, beta, dil)
        assert out.shape == (N, Cout, D, H, W)
        if not jnp.allclose(out, ref, atol=1e-3, rtol=1e-3):
            raise AssertionError(f"Pallas output mismatch vs JAX reference (d={dil})")
    print("KERNEL_OK")
</pallas_src>

<mosaic_0001>
module attributes {stable_mosaic.version = 11 : i64} {
  func.func @_conv_stats_kernel(%arg0: i32, %arg1: memref<1x10x10x8x4xf32, #tpu.memory_space<vmem>>, %arg2: memref<36x128xf32, #tpu.memory_space<vmem>>, %arg3: memref<1x8x8x8x128xf32, #tpu.memory_space<vmem>>, %arg4: memref<1x1x128xf32, #tpu.memory_space<vmem>>, %arg5: memref<1x1x128xf32, #tpu.memory_space<vmem>>) attributes {dimension_semantics = [#tpu.dimension_semantics<parallel>], iteration_bounds = array<i64: 2>, scalar_prefetch = 0 : i64, scratch_operands = 0 : i64, tpu.core_type = #tpu.core_type<tc>, window_params = [{transform_indices = @transform_0, window_bounds = array<i64: 1, 10, 10, 8, 4>}, {pipeline_mode = #tpu.pipeline_mode<synchronous>, transform_indices = @transform_1, window_bounds = array<i64: 36, 128>}, {transform_indices = @transform_2, window_bounds = array<i64: 1, 8, 8, 8, 128>}, {transform_indices = @transform_3, window_bounds = array<i64: 1, 1, 128>}, {transform_indices = @transform_4, window_bounds = array<i64: 1, 1, 128>}]} {
    %cst = arith.constant 0.000000e+00 : f32
    %0 = vector.broadcast %cst : f32 to vector<1x1x128xf32>
    %c0 = arith.constant 0 : index
    %c0_0 = arith.constant 0 : index
    %c0_1 = arith.constant 0 : index
    %1 = vector.load %arg4[%c0, %c0_0, %c0_1] : memref<1x1x128xf32, #tpu.memory_space<vmem>>, vector<1x1x128xf32>
    tpu.vector_store %arg4[%c0, %c0_0, %c0_1], %0 {strides = array<i32>} : memref<1x1x128xf32, #tpu.memory_space<vmem>>, vector<1x1x128xf32>,
    %cst_2 = arith.constant 0.000000e+00 : f32
    %2 = vector.broadcast %cst_2 : f32 to vector<1x1x128xf32>
    %c0_3 = arith.constant 0 : index
    %c0_4 = arith.constant 0 : index
    %c0_5 = arith.constant 0 : index
    %3 = vector.load %arg5[%c0_3, %c0_4, %c0_5] : memref<1x1x128xf32, #tpu.memory_space<vmem>>, vector<1x1x128xf32>
    tpu.vector_store %arg5[%c0_3, %c0_4, %c0_5], %2 {strides = array<i32>} : memref<1x1x128xf32, #tpu.memory_space<vmem>>, vector<1x1x128xf32>,
    %c0_6 = arith.constant 0 : index
    %c0_7 = arith.constant 0 : index
    %4 = vector.load %arg2[%c0_6, %c0_7] : memref<36x128xf32, #tpu.memory_space<vmem>>, vector<36x128xf32>
    %c0_i32 = arith.constant 0 : i32
    %c2_i32 = arith.constant 2 : i32
    %5 = arith.addi %c0_i32, %c2_i32 : i32
    %c1_i32 = arith.constant 1 : i32
    scf.for %arg6 = %c0_i32 to %5 step %c1_i32  : i32 {
      %c4_i32 = arith.constant 4 : i32
      %6 = arith.muli %arg6, %c4_i32 : i32
      %7 = tpu.assume_multiple %6, 4 : i32
      %c0_i32_9 = arith.constant 0 : i32
      %8 = arith.addi %7, %c0_i32_9 : i32
      %c0_10 = arith.constant 0 : index
      %9 = arith.index_cast %8 : i32 to index
      %c0_11 = arith.constant 0 : index
      %c0_12 = arith.constant 0 : index
      %c0_13 = arith.constant 0 : index
      %10 = vector.load %arg1[%c0_10, %9, %c0_11, %c0_12, %c0_13] : memref<1x10x10x8x4xf32, #tpu.memory_space<vmem>>, vector<1x4x8x8x4xf32>
      %11 = vector.shape_cast %10 : vector<1x4x8x8x4xf32> to vector<4x8x8x4xf32>
      %12 = vector.shape_cast %11 : vector<4x8x8x4xf32> to vector<256x4xf32>
      %c0_i32_14 = arith.constant 0 : i32
      %13 = arith.addi %7, %c0_i32_14 : i32
      %c0_15 = arith.constant 0 : index
      %14 = arith.index_cast %13 : i32 to index
      %c1 = arith.constant 1 : index
      %c0_16 = arith.constant 0 : index
      %c0_17 = arith.constant 0 : index
      %15 = vector.load %arg1[%c0_15, %14, %c1, %c0_16, %c0_17] : memref<1x10x10x8x4xf32, #tpu.memory_space<vmem>>, vector<1x4x8x8x4xf32>
      %16 = vector.shape_cast %15 : vector<1x4x8x8x4xf32> to vector<4x8x8x4xf32>
      %17 = vector.shape_cast %16 : vector<4x8x8x4xf32> to vector<256x4xf32>
      %c0_i32_18 = arith.constant 0 : i32
      %18 = arith.addi %7, %c0_i32_18 : i32
      %c0_19 = arith.constant 0 : index
      %19 = arith.index_cast %18 : i32 to index
      %c2 = arith.constant 2 : index
      %c0_20 = arith.constant 0 : index
      %c0_21 = arith.constant 0 : index
      %20 = vector.load %arg1[%c0_19, %19, %c2, %c0_20, %c0_21] : memref<1x10x10x8x4xf32, #tpu.memory_space<vmem>>, vector<1x4x8x8x4xf32>
      %21 = vector.shape_cast %20 : vector<1x4x8x8x4xf32> to vector<4x8x8x4xf32>
      %22 = vector.shape_cast %21 : vector<4x8x8x4xf32> to vector<256x4xf32>
      %c1_i32_22 = arith.constant 1 : i32
      %23 = arith.addi %7, %c1_i32_22 : i32
      %c0_23 = arith.constant 0 : index
      %24 = arith.index_cast %23 : i32 to index
      %c0_24 = arith.constant 0 : index
      %c0_25 = arith.constant 0 : index
      %c0_26 = arith.constant 0 : index
      %25 = vector.load %arg1[%c0_23, %24, %c0_24, %c0_25, %c0_26] : memref<1x10x10x8x4xf32, #tpu.memory_space<vmem>>, vector<1x4x8x8x4xf32>
      %26 = vector.shape_cast %25 : vector<1x4x8x8x4xf32> to vector<4x8x8x4xf32>
      %27 = vector.shape_cast %26 : vector<4x8x8x4xf32> to vector<256x4xf32>
      %c1_i32_27 = arith.constant 1 : i32
      %28 = arith.addi %7, %c1_i32_27 : i32
      %c0_28 = arith.constant 0 : index
      %29 = arith.index_cast %28 : i32 to index
      %c1_29 = arith.constant 1 : index
      %c0_30 = arith.constant 0 : index
      %c0_31 = arith.constant 0 : index
      %30 = vector.load %arg1[%c0_28, %29, %c1_29, %c0_30, %c0_31] : memref<1x10x10x8x4xf32, #tpu.memory_space<vmem>>, vector<1x4x8x8x4xf32>
      %31 = vector.shape_cast %30 : vector<1x4x8x8x4xf32> to vector<4x8x8x4xf32>
      %32 = vector.shape_cast %31 : vector<4x8x8x4xf32> to vector<256x4xf32>
      %c1_i32_32 = arith.constant 1 : i32
      %33 = arith.addi %7, %c1_i32_32 : i32
      %c0_33 = arith.constant 0 : index
      %34 = arith.index_cast %33 : i32 to index
      %c2_34 = arith.constant 2 : index
      %c0_35 = arith.constant 0 : index
      %c0_36 = arith.constant 0 : index
      %35 = vector.load %arg1[%c0_33, %34, %c2_34, %c0_35, %c0_36] : memref<1x10x10x8x4xf32, #tpu.memory_space<vmem>>, vector<1x4x8x8x4xf32>
      %36 = vector.shape_cast %35 : vector<1x4x8x8x4xf32> to vector<4x8x8x4xf32>
      %37 = vector.shape_cast %36 : vector<4x8x8x4xf32> to vector<256x4xf32>
      %c2_i32_37 = arith.constant 2 : i32
      %38 = arith.addi %7, %c2_i32_37 : i32
      %c0_38 = arith.constant 0 : index
      %39 = arith.index_cast %38 : i32 to index
      %c0_39 = arith.constant 0 : index
      %c0_40 = arith.constant 0 : index
      %c0_41 = arith.constant 0 : index
      %40 = vector.load %arg1[%c0_38, %39, %c0_39, %c0_40, %c0_41] : memref<1x10x10x8x4xf32, #tpu.memory_space<vmem>>, vector<1x4x8x8x4xf32>
      %41 = vector.shape_cast %40 : vector<1x4x8x8x4xf32> to vector<4x8x8x4xf32>
      %42 = vector.shape_cast %41 : vector<4x8x8x4xf32> to vector<256x4xf32>
      %c2_i32_42 = arith.constant 2 : i32
      %43 = arith.addi %7, %c2_i32_42 : i32
      %c0_43 = arith.constant 0 : index
      %44 = arith.index_cast %43 : i32 to index
      %c1_44 = arith.constant 1 : index
      %c0_45 = arith.constant 0 : index
      %c0_46 = arith.constant 0 : index
      %45 = vector.load %arg1[%c0_43, %44, %c1_44, %c0_45, %c0_46] : memref<1x10x10x8x4xf32, #tpu.memory_space<vmem>>, vector<1x4x8x8x4xf32>
      %46 = vector.shape_cast %45 : vector<1x4x8x8x4xf32> to vector<4x8x8x4xf32>
      %47 = vector.shape_cast %46 : vector<4x8x8x4xf32> to vector<256x4xf32>
      %c2_i32_47 = arith.constant 2 : i32
      %48 = arith.addi %7, %c2_i32_47 : i32
      %c0_48 = arith.constant 0 : index
      %49 = arith.index_cast %48 : i32 to index
      %c2_49 = arith.constant 2 : index
      %c0_50 = arith.constant 0 : index
      %c0_51 = arith.constant 0 : index
      %50 = vector.load %arg1[%c0_48, %49, %c2_49, %c0_50, %c0_51] : memref<1x10x10x8x4xf32, #tpu.memory_space<vmem>>, vector<1x4x8x8x4xf32>
      %51 = vector.shape_cast %50 : vector<1x4x8x8x4xf32> to vector<4x8x8x4xf32>
      %52 = vector.shape_cast %51 : vector<4x8x8x4xf32> to vector<256x4xf32>
      %53 = tpu.concatenate %12, %17, %22, %27, %32, %37, %42, %47, %52 in 1 : vector<256x4xf32>, vector<256x4xf32>, vector<256x4xf32>, vector<256x4xf32>, vector<256x4xf32>, vector<256x4xf32>, vector<256x4xf32>, vector<256x4xf32>, vector<256x4xf32> -> vector<256x36xf32>
      %cst_52 = arith.constant dense<0.000000e+00> : vector<256x128xf32>
      %54 = tpu.matmul %53, %4, %cst_52 {dimension_numbers = #tpu.dot_dimension_numbers<[1], [0], [0], [1], [0, 0, 1, 1], [], []>} : vector<256x36xf32>, vector<36x128xf32>, vector<256x128xf32> -> vector<256x128xf32>
      %55 = vector.shape_cast %54 : vector<256x128xf32> to vector<4x8x8x128xf32>
      %c0_53 = arith.constant 0 : index
      %56 = arith.index_cast %7 : i32 to index
      %c0_54 = arith.constant 0 : index
      %c0_55 = arith.constant 0 : index
      %c0_56 = arith.constant 0 : index
      %57 = vector.load %arg3[%c0_53, %56, %c0_54, %c0_55, %c0_56] : memref<1x8x8x8x128xf32, #tpu.memory_space<vmem>>, vector<1x4x8x8x128xf32>
      %58 = vector.shape_cast %57 : vector<1x4x8x8x128xf32> to vector<4x8x8x128xf32>
      %59 = vector.shape_cast %55 : vector<4x8x8x128xf32> to vector<1x4x8x8x128xf32>
      tpu.vector_store %arg3[%c0_53, %56, %c0_54, %c0_55, %c0_56], %59 {strides = array<i32>} : memref<1x8x8x8x128xf32, #tpu.memory_space<vmem>>, vector<1x4x8x8x128xf32>,
      %c0_57 = arith.constant 0 : index
      %c0_58 = arith.constant 0 : index
      %c0_59 = arith.constant 0 : index
      %60 = vector.load %arg4[%c0_57, %c0_58, %c0_59] : memref<1x1x128xf32, #tpu.memory_space<vmem>>, vector<1x1x128xf32>
      %cst_60 = arith.constant dense<0.000000e+00> : vector<128xf32>
      %61 = vector.multi_reduction <add>, %54, %cst_60 [0] : vector<256x128xf32> to vector<128xf32>
      %62 = vector.shape_cast %61 : vector<128xf32> to vector<1x1x128xf32>
      %63 = arith.addf %60, %62 : vector<1x1x128xf32>
      %c0_61 = arith.constant 0 : index
      %c0_62 = arith.constant 0 : index
      %c0_63 = arith.constant 0 : index
      %64 = vector.load %arg4[%c0_61, %c0_62, %c0_63] : memref<1x1x128xf32, #tpu.memory_space<vmem>>, vector<1x1x128xf32>
      tpu.vector_store %arg4[%c0_61, %c0_62, %c0_63], %63 {strides = array<i32>} : memref<1x1x128xf32, #tpu.memory_space<vmem>>, vector<1x1x128xf32>,
      %c0_64 = arith.constant 0 : index
      %c0_65 = arith.constant 0 : index
      %c0_66 = arith.constant 0 : index
      %65 = vector.load %arg5[%c0_64, %c0_65, %c0_66] : memref<1x1x128xf32, #tpu.memory_space<vmem>>, vector<1x1x128xf32>
      %66 = arith.mulf %54, %54 : vector<256x128xf32>
      %cst_67 = arith.constant dense<0.000000e+00> : vector<128xf32>
      %67 = vector.multi_reduction <add>, %66, %cst_67 [0] : vector<256x128xf32> to vector<128xf32>
      %68 = vector.shape_cast %67 : vector<128xf32> to vector<1x1x128xf32>
      %69 = arith.addf %65, %68 : vector<1x1x128xf32>
      %c0_68 = arith.constant 0 : index
      %c0_69 = arith.constant 0 : index
      %c0_70 = arith.constant 0 : index
      %70 = vector.load %arg5[%c0_68, %c0_69, %c0_70] : memref<1x1x128xf32, #tpu.memory_space<vmem>>, vector<1x1x128xf32>
      tpu.vector_store %arg5[%c0_68, %c0_69, %c0_70], %69 {strides = array<i32>} : memref<1x1x128xf32, #tpu.memory_space<vmem>>, vector<1x1x128xf32>,
    }
    %c2_i32_8 = arith.constant 2 : i32
    return
  }
  func.func @transform_0(%arg0: i32) -> (i32, i32, i32, i32, i32) {
    %c0_i32 = arith.constant 0 : i32
    %c0_i32_0 = arith.constant 0 : i32
    %c0_i32_1 = arith.constant 0 : i32
    %c0_i32_2 = arith.constant 0 : i32
    %c0_i32_3 = arith.constant 0 : i32
    return %arg0, %c0_i32, %c0_i32_0, %c0_i32_1, %c0_i32_2 : i32, i32, i32, i32, i32
  }
  func.func @transform_1(%arg0: i32) -> (i32, i32) {
    %c0_i32 = arith.constant 0 : i32
    %c0_i32_0 = arith.constant 0 : i32
    %c0_i32_1 = arith.constant 0 : i32
    return %c0_i32, %c0_i32_0 : i32, i32
  }
  func.func @transform_2(%arg0: i32) -> (i32, i32, i32, i32, i32) {
    %c0_i32 = arith.constant 0 : i32
    %c0_i32_0 = arith.constant 0 : i32
    %c0_i32_1 = arith.constant 0 : i32
    %c0_i32_2 = arith.constant 0 : i32
    %c0_i32_3 = arith.constant 0 : i32
    return %arg0, %c0_i32, %c0_i32_0, %c0_i32_1, %c0_i32_2 : i32, i32, i32, i32, i32
  }
  func.func @transform_3(%arg0: i32) -> (i32, i32, i32) {
    %c0_i32 = arith.constant 0 : i32
    %c0_i32_0 = arith.constant 0 : i32
    %c0_i32_1 = arith.constant 0 : i32
    return %arg0, %c0_i32, %c0_i32_0 : i32, i32, i32
  }
  func.func @transform_4(%arg0: i32) -> (i32, i32, i32) {
    %c0_i32 = arith.constant 0 : i32
    %c0_i32_0 = arith.constant 0 : i32
    %c0_i32_1 = arith.constant 0 : i32
    return %arg0, %c0_i32, %c0_i32_0 : i32, i32, i32
  }
}

</mosaic_0001>

<llo_original>
// kernel: tpu_custom_call.1
$region0: #{tpu_custom_call.1}
  #allocation0 [shape = 'u32[]', space=smem, size = 0x4, offset = 0x4, fixed_abs, tag = 'smem constant byte address 0x4 - core index']
  #allocation1 [shape = 'u32[72,128]{1,0:T(1,128)}', space=vmem, size = 0x9000, scoped, tag = 'internal scratch']
  %s0 = inlined_call_operand.vmem [shape: f32[2,10,10,8,4], index: 0, kind: input, shape index: {}]
  %s1 = inlined_call_operand.vmem [shape: f32[36,128], index: 1, kind: input, shape index: {}]
  %s2 = inlined_call_operand.hbm [shape: f32[2,8,8,8,128], index: 2, kind: output, shape index: {0}]
  %s3 = inlined_call_operand.hbm [shape: f32[2,1,128], index: 3, kind: output, shape index: {1}]
  %s4 = inlined_call_operand.hbm [shape: f32[2,1,128], index: 4, kind: output, shape index: {2}]
  %5 = xla_tuple %s2, %s3, %s4
  %s6 = sld [smem:[#allocation0]]
  $region64: #{tpu_custom_call.1} parent=0
    _
  %s8 = ssub.s32 1, %s6
  %s9 = scalar_select 0, %s8, %s6
  $region1: #{tpu_custom_call.1} parent=0
    #allocation2 [shape = 'u8[524288]{0}', space=vmem, size = 0x80000, scoped, tag = 'output window, operand 0']
    #allocation3 [shape = 's32[2]{0}', space=sflag, size = 0x8, scoped, tag = 'scoped memory for tpu_custom_call.1']
    #allocation4 [shape = 'u8[1024]{0}', space=vmem, size = 0x400, scoped, tag = 'output window, operand 1']
    #allocation5 [shape = 's32[2]{0}', space=sflag, size = 0x8, scoped, tag = 'scoped memory for tpu_custom_call.1']
    #allocation6 [shape = 'u8[1024]{0}', space=vmem, size = 0x400, scoped, tag = 'output window, operand 2']
    %10 = vsyncpa [#allocation3], 0
    %s11 = scalar_lea.sflag [#allocation3], 1
    %12 = vsyncpa %s11, 0
    %13 = vsyncpa [#allocation5], 0
    %s14 = scalar_lea.sflag [#allocation5], 1
    %15 = vsyncpa %s14, 0
    loop: start=0, step=1, limit=4
    $region2: #{tpu_custom_call.1} parent=1 // loop_pre_header
      _
    $region3: #{tpu_custom_call.1} parent=1 // loop_header
      %s17 = sphi 0, %s21
      %p18 = scmp.ge.s32.totalorder %s17, 4
      %s27 = sphi 0, %s29
      %s30 = sphi 0, %s27
      %s31 = sphi 0, %s30
      %s47 = sphi 0, %s31
      %s51 = sphi 0, %s51
      %s53 = sphi 0, %s51
      %s54 = sphi 0, %s53
      %s68 = sphi 0, %s54
      %s74 = sphi 0, %s76
      %s77 = sphi 0, %s74
      %s78 = sphi 0, %s77
      %s94 = sphi 0, %s78
      %s100 = sphi 0, %s102
      %s103 = sphi 0, %s100
      %s104 = sphi 0, %s103
      %s120 = sphi 0, %s104
      %s126 = sphi 0, %s128
      %s129 = sphi 0, %s126
      %s130 = sphi 0, %s129
      %s146 = sphi 0, %s130
    $region4: #{tpu_custom_call.1} parent=1 // loop_header_branch
      %20 = sbr.rel (%p18) target = $region8
    $region5: #{tpu_custom_call.1} parent=1 // loop_body
      %s22 = ssub.s32 %s17, 1
      %s23 = ssub.s32 %s17, 2
      %s24 = sadd.s32 %s17, 1
      %s25 = ssub.s32 %s17, %s24
      %p26 = scmp.eq.s32.totalorder %s25, 0
      %s28 = sadd.s32 %s27, 1
      %s29 = scalar_select %p26, %s27, %s28
      %p32 = pneg %p26
      %p33 = scmp.eq.s32.totalorder %s17, 1
      %p34 = por %p32, %p33
      %p35 = scmp.ne.s32.totalorder %s27, %s30
      %p36 = scmp.eq.s32.totalorder %s17, 0
      %p37 = por %p35, %p36
      %p38 = scmp.ne.s32.totalorder %s27, %s30
      %p39 = scmp.eq.s32.totalorder %s22, 1
      %p40 = por %p38, %p39
      %p41 = scmp.ne.s32.totalorder %s30, %s31
      %p42 = scmp.eq.s32.totalorder %s22, 0
      %p43 = por %p41, %p42
      %p44 = scmp.ne.s32.totalorder %s30, %s31
      %p45 = scmp.eq.s32.totalorder %s23, 1
      %p46 = por %p44, %p45
      %p48 = scmp.ne.s32.totalorder %s31, %s47
      %p49 = scmp.eq.s32.totalorder %s23, 0
      %p50 = por %p48, %p49
      %s52 = sadd.s32 %s51, 1
      %p55 = scmp.eq.s32.totalorder %s17, 1
      %p56 = scmp.ne.s32.totalorder %s51, %s53
      %p57 = scmp.eq.s32.totalorder %s17, 0
      %p58 = por %p56, %p57
      %p59 = scmp.ne.s32.totalorder %s51, %s53
      %p60 = scmp.eq.s32.totalorder %s22, 1
      %p61 = por %p59, %p60
      %p62 = scmp.ne.s32.totalorder %s53, %s54
      %p63 = scmp.eq.s32.totalorder %s22, 0
      %p64 = por %p62, %p63
      %p65 = scmp.ne.s32.totalorder %s53, %s54
      %p66 = scmp.eq.s32.totalorder %s23, 1
      %p67 = por %p65, %p66
      %p69 = scmp.ne.s32.totalorder %s54, %s68
      %p70 = scmp.eq.s32.totalorder %s23, 0
      %p71 = por %p69, %p70
      %s72 = ssub.s32 %s17, %s24
      %p73 = scmp.eq.s32.totalorder %s72, 0
      %s75 = sadd.s32 %s74, 1
      %s76 = scalar_select %p73, %s74, %s75
      %p79 = pneg %p73
      %p80 = scmp.eq.s32.totalorder %s17, 1
      %p81 = por %p79, %p80
      %p82 = scmp.ne.s32.totalorder %s74, %s77
      %p83 = scmp.eq.s32.totalorder %s17, 0
      %p84 = por %p82, %p83
      %p85 = scmp.ne.s32.totalorder %s74, %s77
      %p86 = scmp.eq.s32.totalorder %s22, 1
      %p87 = por %p85, %p86
      %p88 = scmp.ne.s32.totalorder %s77, %s78
      %p89 = scmp.eq.s32.totalorder %s22, 0
      %p90 = por %p88, %p89
      %p91 = scmp.ne.s32.totalorder %s77, %s78
      %p92 = scmp.eq.s32.totalorder %s23, 1
      %p93 = por %p91, %p92
      %p95 = scmp.ne.s32.totalorder %s78, %s94
      %p96 = scmp.eq.s32.totalorder %s23, 0
      %p97 = por %p95, %p96
      %s98 = ssub.s32 %s17, %s24
      %p99 = scmp.eq.s32.totalorder %s98, 0
      %s101 = sadd.s32 %s100, 1
      %s102 = scalar_select %p99, %s100, %s101
      %p105 = pneg %p99
      %p106 = scmp.eq.s32.totalorder %s17, 1
      %p107 = por %p105, %p106
      %p108 = scmp.ne.s32.totalorder %s100, %s103
      %p109 = scmp.eq.s32.totalorder %s17, 0
      %p110 = por %p108, %p109
      %p111 = scmp.ne.s32.totalorder %s100, %s103
      %p112 = scmp.eq.s32.totalorder %s22, 1
      %p113 = por %p111, %p112
      %p114 = scmp.ne.s32.totalorder %s103, %s104
      %p115 = scmp.eq.s32.totalorder %s22, 0
      %p116 = por %p114, %p115
      %p117 = scmp.ne.s32.totalorder %s103, %s104
      %p118 = scmp.eq.s32.totalorder %s23, 1
      %p119 = por %p117, %p118
      %p121 = scmp.ne.s32.totalorder %s104, %s120
      %p122 = scmp.eq.s32.totalorder %s23, 0
      %p123 = por %p121, %p122
      %s124 = ssub.s32 %s17, %s24
      %p125 = scmp.eq.s32.totalorder %s124, 0
      %s127 = sadd.s32 %s126, 1
      %s128 = scalar_select %p125, %s126, %s127
      %p131 = pneg %p125
      %p132 = scmp.eq.s32.totalorder %s17, 1
      %p133 = por %p131, %p132
      %p134 = scmp.ne.s32.totalorder %s126, %s129
      %p135 = scmp.eq.s32.totalorder %s17, 0
      %p136 = por %p134, %p135
      %p137 = scmp.ne.s32.totalorder %s126, %s129
      %p138 = scmp.eq.s32.totalorder %s22, 1
      %p139 = por %p137, %p138
      %p140 = scmp.ne.s32.totalorder %s129, %s130
      %p141 = scmp.eq.s32.totalorder %s22, 0
      %p142 = por %p140, %p141
      %p143 = scmp.ne.s32.totalorder %s129, %s130
      %p144 = scmp.eq.s32.totalorder %s23, 1
      %p145 = por %p143, %p144
      %p147 = scmp.ne.s32.totalorder %s130, %s146
      %p148 = scmp.eq.s32.totalorder %s23, 0
      %p149 = por %p147, %p148
      %p150 = scmp.le.s32.totalorder 1, %s17
      %p151 = scmp.lt.s32.totalorder %s17, 3
      %p152 = pnand %p150, %p151
      %p153 = pneg %p152
      // Predicated region
      $region9: #{tpu_custom_call.1} parent=5 // pred_check
        _
      $region10: #{tpu_custom_call.1} parent=5 // pred_check_branch
        %155 = sbr.rel (%p152) target = $region12
      $region11: #{tpu_custom_call.1} parent=5 // pred_region
        %s156 = ssub.s32 %s17, 1
        // Predicated region
        $region13: #{tpu_custom_call.1} parent=11 // pred_check
          %p157 = pneg %p64
        $region14: #{tpu_custom_call.1} parent=11 // pred_check_branch
          %159 = sbr.rel (%p157) target = $region16
        $region15: #{tpu_custom_call.1} parent=11 // pred_region
          _
        $region16: #{tpu_custom_call.1} parent=11 // pred_fallthru
          _
      $region12: #{tpu_custom_call.1} parent=5 // pred_fallthru
        _
      %p160 = scmp.lt.s32.totalorder %s17, 2
      // Predicated region
      $region17: #{tpu_custom_call.1} parent=5 // pred_check
        %p161 = pneg %p160
      $region18: #{tpu_custom_call.1} parent=5 // pred_check_branch
        %163 = sbr.rel (%p161) target = $region20
      $region19: #{tpu_custom_call.1} parent=5 // pred_region
        // Predicated region
        $region21: #{tpu_custom_call.1} parent=19 // pred_check
          %p164 = pneg %p37
        $region22: #{tpu_custom_call.1} parent=19 // pred_check_branch
          %166 = sbr.rel (%p164) target = $region24
        $region23: #{tpu_custom_call.1} parent=19 // pred_region
          %p167 = scmp.lt.s32.totalorder %s17, 1
          %s168 = scalar_select %p167, %s17, 1
          %s169 = smul.addr %s168, 100
          %s170 = smul.addr %s169, 8
          %s171 = scalar_lea.vmem %s0, %s170
        $region24: #{tpu_custom_call.1} parent=19 // pred_fallthru
          _
      $region20: #{tpu_custom_call.1} parent=5 // pred_fallthru
        _
      %p172 = scmp.le.s32.totalorder 1, %s17
      %p173 = scmp.lt.s32.totalorder %s17, 3
      %p174 = pnand %p172, %p173
      %p175 = pneg %p174
      // Predicated region
      $region25: #{tpu_custom_call.1} parent=5 // pred_check
        _
      $region26: #{tpu_custom_call.1} parent=5 // pred_check_branch
        %177 = sbr.rel (%p174) target = $region28
      $region27: #{tpu_custom_call.1} parent=5 // pred_region
        %s178 = ssub.s32 %s17, 1
        %p179 = scmp.lt.s32.totalorder %s22, 1
        %s180 = scalar_select %p179, %s22, 1
        %s181 = smul.addr %s180, 100
        %s182 = smul.addr %s181, 8
        %s183 = scalar_lea.vmem %s0, %s182
        %p184 = pneg %p43
        %p185 = pneg %p40
        %p186 = pneg %p64
        %p187 = pneg %p61
        %p188 = pneg %p90
        %p189 = pneg %p87
        %s190 = sand.u32 %s77, 1
        %s191 = scalar_lea.sflag [#allocation3], %s190
        %s192 = sand.u32 %s77, 1
        %s193 = smul.addr %s192, 512
        %s194 = scalar_lea.vmem [#allocation2], %s193
        %p195 = pneg %p116
        %p196 = pneg %p113
        %s197 = sand.u32 %s22, 1
        %s198 = scalar_lea.sflag [#allocation5], %s197
        %s199 = sand.u32 %s103, 1
        %s200 = scalar_lea.vmem [#allocation4], %s199
        %p201 = pneg %p142
        %p202 = pneg %p139
        %s203 = sand.u32 %s22, 1
        %s204 = scalar_lea.sflag [#allocation5], %s203
        %s205 = sand.u32 %s129, 1
        %s206 = scalar_lea.vmem [#allocation6], %s205
        %p207 = scmp.lt.s32.totalorder %s22, 1
        %s208 = scalar_select %p207, %s22, 1
        %s209 = smul.addr %s208, 100
        %s210 = smul.addr %s209, 8
        %s211 = scalar_lea.vmem %s0, %s210
        %212 = vst [vmem:[%s200] sm:$0x1] 0.0
        %213 = vst [vmem:[%s206] sm:$0x1] 0.0
        %v214 = vld [vmem:[%s1] sm:$0xff]
        %v215 = vld [vmem:[%s1 + $0x8] sm:$0xff]
        %v216 = vld [vmem:[%s1 + $0x10] sm:$0xff]
        %v217 = vld [vmem:[%s1 + $0x18] sm:$0xff]
        %v218 = vld [vmem:[%s1 + $0x20] sm:$0xf]
        loop: start=0, step=1, limit=2
        $region29: #{tpu_custom_call.1} parent=27 // loop_pre_header
          _
        $region30: #{tpu_custom_call.1} parent=27 // loop_header
          %s220 = sphi 0, %s224
          %p221 = scmp.ge.s32.totalorder %s220, 2
        $region31: #{tpu_custom_call.1} parent=27 // loop_header_branch
          %223 = sbr.rel (%p221) target = $region35
        $region32: #{tpu_custom_call.1} parent=27 // loop_body
          %s225 = smul.u32 %s220, 4
          %s226 = smul.u32 %s225, 80
          %s227 = scalar_lea.vmem %s211, %s226
          %v228 = vld [vmem:[%s227] sm:$0xff]
          %v229 = vld [vmem:[%s227 + $0x8] sm:$0xff]
          %v230 = vld [vmem:[%s227 + $0x10] sm:$0xff]
          %v231 = vld [vmem:[%s227 + $0x18] sm:$0xff]
          %v232 = vld [vmem:[%s227 + $0x20] sm:$0xff]
          %v233 = vld [vmem:[%s227 + $0x28] sm:$0xff]
          %v234 = vld [vmem:[%s227 + $0x30] sm:$0xff]
          %v235 = vld [vmem:[%s227 + $0x38] sm:$0xff]
          %v236 = vld [vmem:[%s227 + $0x50] sm:$0xff]
          %v237 = vld [vmem:[%s227 + $0x58] sm:$0xff]
          %v238 = vld [vmem:[%s227 + $0x60] sm:$0xff]
          %v239 = vld [vmem:[%s227 + $0x68] sm:$0xff]
          %v240 = vld [vmem:[%s227 + $0x70] sm:$0xff]
          %v241 = vld [vmem:[%s227 + $0x78] sm:$0xff]
          %v242 = vld [vmem:[%s227 + $0x80] sm:$0xff]
          %v243 = vld [vmem:[%s227 + $0x88] sm:$0xff]
          %v244 = vld [vmem:[%s227 + $0xa0] sm:$0xff]
          %v245 = vld [vmem:[%s227 + $0xa8] sm:$0xff]
          %v246 = vld [vmem:[%s227 + $0xb0] sm:$0xff]
          %v247 = vld [vmem:[%s227 + $0xb8] sm:$0xff]
          %v248 = vld [vmem:[%s227 + $0xc0] sm:$0xff]
          %v249 = vld [vmem:[%s227 + $0xc8] sm:$0xff]
          %v250 = vld [vmem:[%s227 + $0xd0] sm:$0xff]
          %v251 = vld [vmem:[%s227 + $0xd8] sm:$0xff]
          %v252 = vld [vmem:[%s227 + $0xf0] sm:$0xff]
          %v253 = vld [vmem:[%s227 + $0xf8] sm:$0xff]
          %v254 = vld [vmem:[%s227 + $0x100] sm:$0xff]
          %v255 = vld [vmem:[%s227 + $0x108] sm:$0xff]
          %v256 = vld [vmem:[%s227 + $0x110] sm:$0xff]
          %v257 = vld [vmem:[%s227 + $0x118] sm:$0xff]
          %v258 = vld [vmem:[%s227 + $0x120] sm:$0xff]
          %v259 = vld [vmem:[%s227 + $0x128] sm:$0xff]
          %s260 = sadd.s32 8, %s226
          %s261 = scalar_lea.vmem %s211, %s260
          %v262 = vld [vmem:[%s261] sm:$0xff]
          %v263 = vld [vmem:[%s261 + $0x8] sm:$0xff]
          %v264 = vld [vmem:[%s261 + $0x10] sm:$0xff]
          %v265 = vld [vmem:[%s261 + $0x18] sm:$0xff]
          %v266 = vld [vmem:[%s261 + $0x20] sm:$0xff]
          %v267 = vld [vmem:[%s261 + $0x28] sm:$0xff]
          %v268 = vld [vmem:[%s261 + $0x30] sm:$0xff]
          %v269 = vld [vmem:[%s261 + $0x38] sm:$0xff]
          %v270 = vld [vmem:[%s261 + $0x50] sm:$0xff]
          %v271 = vld [vmem:[%s261 + $0x58] sm:$0xff]
          %v272 = vld [vmem:[%s261 + $0x60] sm:$0xff]
          %v273 = vld [vmem:[%s261 + $0x68] sm:$0xff]
          %v274 = vld [vmem:[%s261 + $0x70] sm:$0xff]
          %v275 = vld [vmem:[%s261 + $0x78] sm:$0xff]
          %v276 = vld [vmem:[%s261 + $0x80] sm:$0xff]
          %v277 = vld [vmem:[%s261 + $0x88] sm:$0xff]
          %v278 = vld [vmem:[%s261 + $0xa0] sm:$0xff]
          %v279 = vld [vmem:[%s261 + $0xa8] sm:$0xff]
          %v280 = vld [vmem:[%s261 + $0xb0] sm:$0xff]
          %v281 = vld [vmem:[%s261 + $0xb8] sm:$0xff]
          %v282 = vld [vmem:[%s261 + $0xc0] sm:$0xff]
          %v283 = vld [vmem:[%s261 + $0xc8] sm:$0xff]
          %v284 = vld [vmem:[%s261 + $0xd0] sm:$0xff]
          %v285 = vld [vmem:[%s261 + $0xd8] sm:$0xff]
          %v286 = vld [vmem:[%s261 + $0xf0] sm:$0xff]
          %v287 = vld [vmem:[%s261 + $0xf8] sm:$0xff]
          %v288 = vld [vmem:[%s261 + $0x100] sm:$0xff]
          %v289 = vld [vmem:[%s261 + $0x108] sm:$0xff]
          %v290 = vld [vmem:[%s261 + $0x110] sm:$0xff]
          %v291 = vld [vmem:[%s261 + $0x118] sm:$0xff]
          %v292 = vld [vmem:[%s261 + $0x120] sm:$0xff]
          %v293 = vld [vmem:[%s261 + $0x128] sm:$0xff]
          %s294 = sadd.s32 16, %s226
          %s295 = scalar_lea.vmem %s211, %s294
          %v296 = vld [vmem:[%s295] sm:$0xff]
          %v297 = vld [vmem:[%s295 + $0x8] sm:$0xff]
          %v298 = vld [vmem:[%s295 + $0x10] sm:$0xff]
          %v299 = vld [vmem:[%s295 + $0x18] sm:$0xff]
          %v300 = vld [vmem:[%s295 + $0x20] sm:$0xff]
          %v301 = vld [vmem:[%s295 + $0x28] sm:$0xff]
          %v302 = vld [vmem:[%s295 + $0x30] sm:$0xff]
          %v303 = vld [vmem:[%s295 + $0x38] sm:$0xff]
          %v304 = vld [vmem:[%s295 + $0x50] sm:$0xff]
          %v305 = vld [vmem:[%s295 + $0x58] sm:$0xff]
          %v306 = vld [vmem:[%s295 + $0x60] sm:$0xff]
          %v307 = vld [vmem:[%s295 + $0x68] sm:$0xff]
          %v308 = vld [vmem:[%s295 + $0x70] sm:$0xff]
          %v309 = vld [vmem:[%s295 + $0x78] sm:$0xff]
          %v310 = vld [vmem:[%s295 + $0x80] sm:$0xff]
          %v311 = vld [vmem:[%s295 + $0x88] sm:$0xff]
          %v312 = vld [vmem:[%s295 + $0xa0] sm:$0xff]
          %v313 = vld [vmem:[%s295 + $0xa8] sm:$0xff]
          %v314 = vld [vmem:[%s295 + $0xb0] sm:$0xff]
          %v315 = vld [vmem:[%s295 + $0xb8] sm:$0xff]
          %v316 = vld [vmem:[%s295 + $0xc0] sm:$0xff]
          %v317 = vld [vmem:[%s295 + $0xc8] sm:$0xff]
          %v318 = vld [vmem:[%s295 + $0xd0] sm:$0xff]
          %v319 = vld [vmem:[%s295 + $0xd8] sm:$0xff]
          %v320 = vld [vmem:[%s295 + $0xf0] sm:$0xff]
          %v321 = vld [vmem:[%s295 + $0xf8] sm:$0xff]
          %v322 = vld [vmem:[%s295 + $0x100] sm:$0xff]
          %v323 = vld [vmem:[%s295 + $0x108] sm:$0xff]
          %v324 = vld [vmem:[%s295 + $0x110] sm:$0xff]
          %v325 = vld [vmem:[%s295 + $0x118] sm:$0xff]
          %v326 = vld [vmem:[%s295 + $0x120] sm:$0xff]
          %v327 = vld [vmem:[%s295 + $0x128] sm:$0xff]
          %s328 = sadd.s32 %s225, 1
          %s329 = smul.u32 %s328, 80
          %s330 = scalar_lea.vmem %s211, %s329
          %v331 = vld [vmem:[%s330] sm:$0xff]
          %v332 = vld [vmem:[%s330 + $0x8] sm:$0xff]
          %v333 = vld [vmem:[%s330 + $0x10] sm:$0xff]
          %v334 = vld [vmem:[%s330 + $0x18] sm:$0xff]
          %v335 = vld [vmem:[%s330 + $0x20] sm:$0xff]
          %v336 = vld [vmem:[%s330 + $0x28] sm:$0xff]
          %v337 = vld [vmem:[%s330 + $0x30] sm:$0xff]
          %v338 = vld [vmem:[%s330 + $0x38] sm:$0xff]
          %v339 = vld [vmem:[%s330 + $0x50] sm:$0xff]
          %v340 = vld [vmem:[%s330 + $0x58] sm:$0xff]
          %v341 = vld [vmem:[%s330 + $0x60] sm:$0xff]
          %v342 = vld [vmem:[%s330 + $0x68] sm:$0xff]
          %v343 = vld [vmem:[%s330 + $0x70] sm:$0xff]
          %v344 = vld [vmem:[%s330 + $0x78] sm:$0xff]
          %v345 = vld [vmem:[%s330 + $0x80] sm:$0xff]
          %v346 = vld [vmem:[%s330 + $0x88] sm:$0xff]
          %v347 = vld [vmem:[%s330 + $0xa0] sm:$0xff]
          %v348 = vld [vmem:[%s330 + $0xa8] sm:$0xff]
          %v349 = vld [vmem:[%s330 + $0xb0] sm:$0xff]
          %v350 = vld [vmem:[%s330 + $0xb8] sm:$0xff]
          %v351 = vld [vmem:[%s330 + $0xc0] sm:$0xff]
          %v352 = vld [vmem:[%s330 + $0xc8] sm:$0xff]
          %v353 = vld [vmem:[%s330 + $0xd0] sm:$0xff]
          %v354 = vld [vmem:[%s330 + $0xd8] sm:$0xff]
          %v355 = vld [vmem:[%s330 + $0xf0] sm:$0xff]
          %v356 = vld [vmem:[%s330 + $0xf8] sm:$0xff]
          %v357 = vld [vmem:[%s330 + $0x100] sm:$0xff]
          %v358 = vld [vmem:[%s330 + $0x108] sm:$0xff]
          %v359 = vld [vmem:[%s330 + $0x110] sm:$0xff]
          %v360 = vld [vmem:[%s330 + $0x118] sm:$0xff]
          %v361 = vld [vmem:[%s330 + $0x120] sm:$0xff]
          %v362 = vld [vmem:[%s330 + $0x128] sm:$0xff]
          %s363 = sadd.s32 8, %s329
          %s364 = scalar_lea.vmem %s211, %s363
          %v365 = vld [vmem:[%s364] sm:$0xff]
          %v366 = vld [vmem:[%s364 + $0x8] sm:$0xff]
          %v367 = vld [vmem:[%s364 + $0x10] sm:$0xff]
          %v368 = vld [vmem:[%s364 + $0x18] sm:$0xff]
          %v369 = vld [vmem:[%s364 + $0x20] sm:$0xff]
          %v370 = vld [vmem:[%s364 + $0x28] sm:$0xff]
          %v371 = vld [vmem:[%s364 + $0x30] sm:$0xff]
          %v372 = vld [vmem:[%s364 + $0x38] sm:$0xff]
          %v373 = vld [vmem:[%s364 + $0x50] sm:$0xff]
          %v374 = vld [vmem:[%s364 + $0x58] sm:$0xff]
          %v375 = vld [vmem:[%s364 + $0x60] sm:$0xff]
          %v376 = vld [vmem:[%s364 + $0x68] sm:$0xff]
          %v377 = vld [vmem:[%s364 + $0x70] sm:$0xff]
          %v378 = vld [vmem:[%s364 + $0x78] sm:$0xff]
          %v379 = vld [vmem:[%s364 + $0x80] sm:$0xff]
          %v380 = vld [vmem:[%s364 + $0x88] sm:$0xff]
          %v381 = vld [vmem:[%s364 + $0xa0] sm:$0xff]
          %v382 = vld [vmem:[%s364 + $0xa8] sm:$0xff]
          %v383 = vld [vmem:[%s364 + $0xb0] sm:$0xff]
          %v384 = vld [vmem:[%s364 + $0xb8] sm:$0xff]
          %v385 = vld [vmem:[%s364 + $0xc0] sm:$0xff]
          %v386 = vld [vmem:[%s364 + $0xc8] sm:$0xff]
          %v387 = vld [vmem:[%s364 + $0xd0] sm:$0xff]
          %v388 = vld [vmem:[%s364 + $0xd8] sm:$0xff]
          %v389 = vld [vmem:[%s364 + $0xf0] sm:$0xff]
          %v390 = vld [vmem:[%s364 + $0xf8] sm:$0xff]
          %v391 = vld [vmem:[%s364 + $0x100] sm:$0xff]
          %v392 = vld [vmem:[%s364 + $0x108] sm:$0xff]
          %v393 = vld [vmem:[%s364 + $0x110] sm:$0xff]
          %v394 = vld [vmem:[%s364 + $0x118] sm:$0xff]
          %v395 = vld [vmem:[%s364 + $0x120] sm:$0xff]
          %v396 = vld [vmem:[%s364 + $0x128] sm:$0xff]
          %s397 = sadd.s32 16, %s329
          %s398 = scalar_lea.vmem %s211, %s397
          %v399 = vld [vmem:[%s398] sm:$0xff]
          %v400 = vld [vmem:[%s398 + $0x8] sm:$0xff]
          %v401 = vld [vmem:[%s398 + $0x10] sm:$0xff]
          %v402 = vld [vmem:[%s398 + $0x18] sm:$0xff]
          %v403 = vld [vmem:[%s398 + $0x20] sm:$0xff]
          %v404 = vld [vmem:[%s398 + $0x28] sm:$0xff]
          %v405 = vld [vmem:[%s398 + $0x30] sm:$0xff]
          %v406 = vld [vmem:[%s398 + $0x38] sm:$0xff]
          %v407 = vld [vmem:[%s398 + $0x50] sm:$0xff]
          %v408 = vld [vmem:[%s398 + $0x58] sm:$0xff]
          %v409 = vld [vmem:[%s398 + $0x60] sm:$0xff]
          %v410 = vld [vmem:[%s398 + $0x68] sm:$0xff]
          %v411 = vld [vmem:[%s398 + $0x70] sm:$0xff]
          %v412 = vld [vmem:[%s398 + $0x78] sm:$0xff]
          %v413 = vld [vmem:[%s398 + $0x80] sm:$0xff]
          %v414 = vld [vmem:[%s398 + $0x88] sm:$0xff]
          %v415 = vld [vmem:[%s398 + $0xa0] sm:$0xff]
          %v416 = vld [vmem:[%s398 + $0xa8] sm:$0xff]
          %v417 = vld [vmem:[%s398 + $0xb0] sm:$0xff]
          %v418 = vld [vmem:[%s398 + $0xb8] sm:$0xff]
          %v419 = vld [vmem:[%s398 + $0xc0] sm:$0xff]
          %v420 = vld [vmem:[%s398 + $0xc8] sm:$0xff]
          %v421 = vld [vmem:[%s398 + $0xd0] sm:$0xff]
          %v422 = vld [vmem:[%s398 + $0xd8] sm:$0xff]
          %v423 = vld [vmem:[%s398 + $0xf0] sm:$0xff]
          %v424 = vld [vmem:[%s398 + $0xf8] sm:$0xff]
          %v425 = vld [vmem:[%s398 + $0x100] sm:$0xff]
          %v426 = vld [vmem:[%s398 + $0x108] sm:$0xff]
          %v427 = vld [vmem:[%s398 + $0x110] sm:$0xff]
          %v428 = vld [vmem:[%s398 + $0x118] sm:$0xff]
          %v429 = vld [vmem:[%s398 + $0x120] sm:$0xff]
          %v430 = vld [vmem:[%s398 + $0x128] sm:$0xff]
          %s431 = sadd.s32 %s225, 2
          %s432 = smul.u32 %s431, 80
          %s433 = scalar_lea.vmem %s211, %s432
          %v434 = vld [vmem:[%s433] sm:$0xff]
          %v435 = vld [vmem:[%s433 + $0x8] sm:$0xff]
          %v436 = vld [vmem:[%s433 + $0x10] sm:$0xff]
          %v437 = vld [vmem:[%s433 + $0x18] sm:$0xff]
          %v438 = vld [vmem:[%s433 + $0x20] sm:$0xff]
          %v439 = vld [vmem:[%s433 + $0x28] sm:$0xff]
          %v440 = vld [vmem:[%s433 + $0x30] sm:$0xff]
          %v441 = vld [vmem:[%s433 + $0x38] sm:$0xff]
          %v442 = vld [vmem:[%s433 + $0x50] sm:$0xff]
          %v443 = vld [vmem:[%s433 + $0x58] sm:$0xff]
          %v444 = vld [vmem:[%s433 + $0x60] sm:$0xff]
          %v445 = vld [vmem:[%s433 + $0x68] sm:$0xff]
          %v446 = vld [vmem:[%s433 + $0x70] sm:$0xff]
          %v447 = vld [vmem:[%s433 + $0x78] sm:$0xff]
          %v448 = vld [vmem:[%s433 + $0x80] sm:$0xff]
          %v449 = vld [vmem:[%s433 + $0x88] sm:$0xff]
          %v450 = vld [vmem:[%s433 + $0xa0] sm:$0xff]
          %v451 = vld [vmem:[%s433 + $0xa8] sm:$0xff]
          %v452 = vld [vmem:[%s433 + $0xb0] sm:$0xff]
          %v453 = vld [vmem:[%s433 + $0xb8] sm:$0xff]
          %v454 = vld [vmem:[%s433 + $0xc0] sm:$0xff]
          %v455 = vld [vmem:[%s433 + $0xc8] sm:$0xff]
          %v456 = vld [vmem:[%s433 + $0xd0] sm:$0xff]
          %v457 = vld [vmem:[%s433 + $0xd8] sm:$0xff]
          %v458 = vld [vmem:[%s433 + $0xf0] sm:$0xff]
          %v459 = vld [vmem:[%s433 + $0xf8] sm:$0xff]
          %v460 = vld [vmem:[%s433 + $0x100] sm:$0xff]
          %v461 = vld [vmem:[%s433 + $0x108] sm:$0xff]
          %v462 = vld [vmem:[%s433 + $0x110] sm:$0xff]
          %v463 = vld [vmem:[%s433 + $0x118] sm:$0xff]
          %v464 = vld [vmem:[%s433 + $0x120] sm:$0xff]
          %v465 = vld [vmem:[%s433 + $0x128] sm:$0xff]
          %s466 = sadd.s32 8, %s432
          %s467 = scalar_lea.vmem %s211, %s466
          %v468 = vld [vmem:[%s467] sm:$0xff]
          %v469 = vld [vmem:[%s467 + $0x8] sm:$0xff]
          %v470 = vld [vmem:[%s467 + $0x10] sm:$0xff]
          %v471 = vld [vmem:[%s467 + $0x18] sm:$0xff]
          %v472 = vld [vmem:[%s467 + $0x20] sm:$0xff]
          %v473 = vld [vmem:[%s467 + $0x28] sm:$0xff]
          %v474 = vld [vmem:[%s467 + $0x30] sm:$0xff]
          %v475 = vld [vmem:[%s467 + $0x38] sm:$0xff]
          %v476 = vld [vmem:[%s467 + $0x50] sm:$0xff]
          %v477 = vld [vmem:[%s467 + $0x58] sm:$0xff]
          %v478 = vld [vmem:[%s467 + $0x60] sm:$0xff]
          %v479 = vld [vmem:[%s467 + $0x68] sm:$0xff]
          %v480 = vld [vmem:[%s467 + $0x70] sm:$0xff]
          %v481 = vld [vmem:[%s467 + $0x78] sm:$0xff]
          %v482 = vld [vmem:[%s467 + $0x80] sm:$0xff]
          %v483 = vld [vmem:[%s467 + $0x88] sm:$0xff]
          %v484 = vld [vmem:[%s467 + $0xa0] sm:$0xff]
          %v485 = vld [vmem:[%s467 + $0xa8] sm:$0xff]
          %v486 = vld [vmem:[%s467 + $0xb0] sm:$0xff]
          %v487 = vld [vmem:[%s467 + $0xb8] sm:$0xff]
          %v488 = vld [vmem:[%s467 + $0xc0] sm:$0xff]
          %v489 = vld [vmem:[%s467 + $0xc8] sm:$0xff]
          %v490 = vld [vmem:[%s467 + $0xd0] sm:$0xff]
          %v491 = vld [vmem:[%s467 + $0xd8] sm:$0xff]
          %v492 = vld [vmem:[%s467 + $0xf0] sm:$0xff]
          %v493 = vld [vmem:[%s467 + $0xf8] sm:$0xff]
          %v494 = vld [vmem:[%s467 + $0x100] sm:$0xff]
          %v495 = vld [vmem:[%s467 + $0x108] sm:$0xff]
          %v496 = vld [vmem:[%s467 + $0x110] sm:$0xff]
          %v497 = vld [vmem:[%s467 + $0x118] sm:$0xff]
          %v498 = vld [vmem:[%s467 + $0x120] sm:$0xff]
          %v499 = vld [vmem:[%s467 + $0x128] sm:$0xff]
          %s500 = sadd.s32 16, %s432
          %s501 = scalar_lea.vmem %s211, %s500
          %v502 = vld [vmem:[%s501] sm:$0xff]
          %v503 = vld [vmem:[%s501 + $0x8] sm:$0xff]
          %v504 = vld [vmem:[%s501 + $0x10] sm:$0xff]
          %v505 = vld [vmem:[%s501 + $0x18] sm:$0xff]
          %v506 = vld [vmem:[%s501 + $0x20] sm:$0xff]
          %v507 = vld [vmem:[%s501 + $0x28] sm:$0xff]
          %v508 = vld [vmem:[%s501 + $0x30] sm:$0xff]
          %v509 = vld [vmem:[%s501 + $0x38] sm:$0xff]
          %v510 = vld [vmem:[%s501 + $0x50] sm:$0xff]
          %v511 = vld [vmem:[%s501 + $0x58] sm:$0xff]
          %v512 = vld [vmem:[%s501 + $0x60] sm:$0xff]
          %v513 = vld [vmem:[%s501 + $0x68] sm:$0xff]
          %v514 = vld [vmem:[%s501 + $0x70] sm:$0xff]
          %v515 = vld [vmem:[%s501 + $0x78] sm:$0xff]
          %v516 = vld [vmem:[%s501 + $0x80] sm:$0xff]
          %v517 = vld [vmem:[%s501 + $0x88] sm:$0xff]
          %v518 = vld [vmem:[%s501 + $0xa0] sm:$0xff]
          %v519 = vld [vmem:[%s501 + $0xa8] sm:$0xff]
          %v520 = vld [vmem:[%s501 + $0xb0] sm:$0xff]
          %v521 = vld [vmem:[%s501 + $0xb8] sm:$0xff]
          %v522 = vld [vmem:[%s501 + $0xc0] sm:$0xff]
          %v523 = vld [vmem:[%s501 + $0xc8] sm:$0xff]
          %v524 = vld [vmem:[%s501 + $0xd0] sm:$0xff]
          %v525 = vld [vmem:[%s501 + $0xd8] sm:$0xff]
          %v526 = vld [vmem:[%s501 + $0xf0] sm:$0xff]
          %v527 = vld [vmem:[%s501 + $0xf8] sm:$0xff]
          %v528 = vld [vmem:[%s501 + $0x100] sm:$0xff]
          %v529 = vld [vmem:[%s501 + $0x108] sm:$0xff]
          %v530 = vld [vmem:[%s501 + $0x110] sm:$0xff]
          %v531 = vld [vmem:[%s501 + $0x118] sm:$0xff]
          %v532 = vld [vmem:[%s501 + $0x120] sm:$0xff]
          %v533 = vld [vmem:[%s501 + $0x128] sm:$0xff]
          %566 = vrot.lane.b32.xlu0 %v262, 4
          %v567 = vpop.permute.xlu0 %566
          %568 = vrot.lane.b32.xlu0 %v263, 4
          %v569 = vpop.permute.xlu0 %568
          %570 = vrot.lane.b32.xlu0 %v264, 4
          %v571 = vpop.permute.xlu0 %570
          %572 = vrot.lane.b32.xlu0 %v265, 4
          %v573 = vpop.permute.xlu0 %572
          %574 = vrot.lane.b32.xlu0 %v266, 4
          %v575 = vpop.permute.xlu0 %574
          %576 = vrot.lane.b32.xlu0 %v267, 4
          %v577 = vpop.permute.xlu0 %576
          %578 = vrot.lane.b32.xlu0 %v268, 4
          %v579 = vpop.permute.xlu0 %578
          %580 = vrot.lane.b32.xlu0 %v269, 4
          %v581 = vpop.permute.xlu0 %580
          %582 = vrot.lane.b32.xlu0 %v270, 4
          %v583 = vpop.permute.xlu0 %582
          %584 = vrot.lane.b32.xlu0 %v271, 4
          %v585 = vpop.permute.xlu0 %584
          %586 = vrot.lane.b32.xlu0 %v272, 4
          %v587 = vpop.permute.xlu0 %586
          %588 = vrot.lane.b32.xlu0 %v273, 4
          %v589 = vpop.permute.xlu0 %588
          %590 = vrot.lane.b32.xlu0 %v274, 4
          %v591 = vpop.permute.xlu0 %590
          %592 = vrot.lane.b32.xlu0 %v275, 4
          %v593 = vpop.permute.xlu0 %592
          %594 = vrot.lane.b32.xlu0 %v276, 4
          %v595 = vpop.permute.xlu0 %594
          %596 = vrot.lane.b32.xlu0 %v277, 4
          %v597 = vpop.permute.xlu0 %596
          %598 = vrot.lane.b32.xlu0 %v278, 4
          %v599 = vpop.permute.xlu0 %598
          %600 = vrot.lane.b32.xlu0 %v279, 4
          %v601 = vpop.permute.xlu0 %600
          %602 = vrot.lane.b32.xlu0 %v280, 4
          %v603 = vpop.permute.xlu0 %602
          %604 = vrot.lane.b32.xlu0 %v281, 4
          %v605 = vpop.permute.xlu0 %604
          %606 = vrot.lane.b32.xlu0 %v282, 4
          %v607 = vpop.permute.xlu0 %606
          %608 = vrot.lane.b32.xlu0 %v283, 4
          %v609 = vpop.permute.xlu0 %608
          %610 = vrot.lane.b32.xlu0 %v284, 4
          %v611 = vpop.permute.xlu0 %610
          %612 = vrot.lane.b32.xlu0 %v285, 4
          %v613 = vpop.permute.xlu0 %612
          %614 = vrot.lane.b32.xlu0 %v286, 4
          %v615 = vpop.permute.xlu0 %614
          %616 = vrot.lane.b32.xlu0 %v287, 4
          %v617 = vpop.permute.xlu0 %616
          %618 = vrot.lane.b32.xlu0 %v288, 4
          %v619 = vpop.permute.xlu0 %618
          %620 = vrot.lane.b32.xlu0 %v289, 4
          %v621 = vpop.permute.xlu0 %620
          %622 = vrot.lane.b32.xlu0 %v290, 4
          %v623 = vpop.permute.xlu0 %622
          %624 = vrot.lane.b32.xlu0 %v291, 4
          %v625 = vpop.permute.xlu0 %624
          %626 = vrot.lane.b32.xlu0 %v292, 4
          %v627 = vpop.permute.xlu0 %626
          %628 = vrot.lane.b32.xlu0 %v293, 4
          %v629 = vpop.permute.xlu0 %628
          %694 = vrot.lane.b32.xlu0 %v296, 8
          %v695 = vpop.permute.xlu0 %694
          %696 = vrot.lane.b32.xlu0 %v297, 8
          %v697 = vpop.permute.xlu0 %696
          %698 = vrot.lane.b32.xlu0 %v298, 8
          %v699 = vpop.permute.xlu0 %698
          %700 = vrot.lane.b32.xlu0 %v299, 8
          %v701 = vpop.permute.xlu0 %700
          %702 = vrot.lane.b32.xlu0 %v300, 8
          %v703 = vpop.permute.xlu0 %702
          %704 = vrot.lane.b32.xlu0 %v301, 8
          %v705 = vpop.permute.xlu0 %704
          %706 = vrot.lane.b32.xlu0 %v302, 8
          %v707 = vpop.permute.xlu0 %706
          %708 = vrot.lane.b32.xlu0 %v303, 8
          %v709 = vpop.permute.xlu0 %708
          %710 = vrot.lane.b32.xlu0 %v304, 8
          %v711 = vpop.permute.xlu0 %710
          %712 = vrot.lane.b32.xlu0 %v305, 8
          %v713 = vpop.permute.xlu0 %712
          %714 = vrot.lane.b32.xlu0 %v306, 8
          %v715 = vpop.permute.xlu0 %714
          %716 = vrot.lane.b32.xlu0 %v307, 8
          %v717 = vpop.permute.xlu0 %716
          %718 = vrot.lane.b32.xlu0 %v308, 8
          %v719 = vpop.permute.xlu0 %718
          %720 = vrot.lane.b32.xlu0 %v309, 8
          %v721 = vpop.permute.xlu0 %720
          %722 = vrot.lane.b32.xlu0 %v310, 8
          %v723 = vpop.permute.xlu0 %722
          %724 = vrot.lane.b32.xlu0 %v311, 8
          %v725 = vpop.permute.xlu0 %724
          %726 = vrot.lane.b32.xlu0 %v312, 8
          %v727 = vpop.permute.xlu0 %726
          %728 = vrot.lane.b32.xlu0 %v313, 8
          %v729 = vpop.permute.xlu0 %728
          %730 = vrot.lane.b32.xlu0 %v314, 8
          %v731 = vpop.permute.xlu0 %730
          %732 = vrot.lane.b32.xlu0 %v315, 8
          %v733 = vpop.permute.xlu0 %732
          %734 = vrot.lane.b32.xlu0 %v316, 8
          %v735 = vpop.permute.xlu0 %734
          %736 = vrot.lane.b32.xlu0 %v317, 8
          %v737 = vpop.permute.xlu0 %736
          %738 = vrot.lane.b32.xlu0 %v318, 8
          %v739 = vpop.permute.xlu0 %738
          %740 = vrot.lane.b32.xlu0 %v319, 8
          %v741 = vpop.permute.xlu0 %740
          %742 = vrot.lane.b32.xlu0 %v320, 8
          %v743 = vpop.permute.xlu0 %742
          %744 = vrot.lane.b32.xlu0 %v321, 8
          %v745 = vpop.permute.xlu0 %744
          %746 = vrot.lane.b32.xlu0 %v322, 8
          %v747 = vpop.permute.xlu0 %746
          %748 = vrot.lane.b32.xlu0 %v323, 8
          %v749 = vpop.permute.xlu0 %748
          %750 = vrot.lane.b32.xlu0 %v324, 8
          %v751 = vpop.permute.xlu0 %750
          %752 = vrot.lane.b32.xlu0 %v325, 8
          %v753 = vpop.permute.xlu0 %752
          %754 = vrot.lane.b32.xlu0 %v326, 8
          %v755 = vpop.permute.xlu0 %754
          %756 = vrot.lane.b32.xlu0 %v327, 8
          %v757 = vpop.permute.xlu0 %756
          %822 = vrot.lane.b32.xlu0 %v331, 12
          %v823 = vpop.permute.xlu0 %822
          %824 = vrot.lane.b32.xlu0 %v332, 12
          %v825 = vpop.permute.xlu0 %824
          %826 = vrot.lane.b32.xlu0 %v333, 12
          %v827 = vpop.permute.xlu0 %826
          %828 = vrot.lane.b32.xlu0 %v334, 12
          %v829 = vpop.permute.xlu0 %828
          %830 = vrot.lane.b32.xlu0 %v335, 12
          %v831 = vpop.permute.xlu0 %830
          %832 = vrot.lane.b32.xlu0 %v336, 12
          %v833 = vpop.permute.xlu0 %832
          %834 = vrot.lane.b32.xlu0 %v337, 12
          %v835 = vpop.permute.xlu0 %834
          %836 = vrot.lane.b32.xlu0 %v338, 12
          %v837 = vpop.permute.xlu0 %836
          %838 = vrot.lane.b32.xlu0 %v339, 12
          %v839 = vpop.permute.xlu0 %838
          %840 = vrot.lane.b32.xlu0 %v340, 12
          %v841 = vpop.permute.xlu0 %840
          %842 = vrot.lane.b32.xlu0 %v341, 12
          %v843 = vpop.permute.xlu0 %842
          %844 = vrot.lane.b32.xlu0 %v342, 12
          %v845 = vpop.permute.xlu0 %844
          %846 = vrot.lane.b32.xlu0 %v343, 12
          %v847 = vpop.permute.xlu0 %846
          %848 = vrot.lane.b32.xlu0 %v344, 12
          %v849 = vpop.permute.xlu0 %848
          %850 = vrot.lane.b32.xlu0 %v345, 12
          %v851 = vpop.permute.xlu0 %850
          %852 = vrot.lane.b32.xlu0 %v346, 12
          %v853 = vpop.permute.xlu0 %852
          %854 = vrot.lane.b32.xlu0 %v347, 12
          %v855 = vpop.permute.xlu0 %854
          %856 = vrot.lane.b32.xlu0 %v348, 12
          %v857 = vpop.permute.xlu0 %856
          %858 = vrot.lane.b32.xlu0 %v349, 12
          %v859 = vpop.permute.xlu0 %858
          %860 = vrot.lane.b32.xlu0 %v350, 12
          %v861 = vpop.permute.xlu0 %860
          %862 = vrot.lane.b32.xlu0 %v351, 12
          %v863 = vpop.permute.xlu0 %862
          %864 = vrot.lane.b32.xlu0 %v352, 12
          %v865 = vpop.permute.xlu0 %864
          %866 = vrot.lane.b32.xlu0 %v353, 12
          %v867 = vpop.permute.xlu0 %866
          %868 = vrot.lane.b32.xlu0 %v354, 12
          %v869 = vpop.permute.xlu0 %868
          %870 = vrot.lane.b32.xlu0 %v355, 12
          %v871 = vpop.permute.xlu0 %870
          %872 = vrot.lane.b32.xlu0 %v356, 12
          %v873 = vpop.permute.xlu0 %872
          %874 = vrot.lane.b32.xlu0 %v357, 12
          %v875 = vpop.permute.xlu0 %874
          %876 = vrot.lane.b32.xlu0 %v358, 12
          %v877 = vpop.permute.xlu0 %876
          %878 = vrot.lane.b32.xlu0 %v359, 12
          %v879 = vpop.permute.xlu0 %878
          %880 = vrot.lane.b32.xlu0 %v360, 12
          %v881 = vpop.permute.xlu0 %880
          %882 = vrot.lane.b32.xlu0 %v361, 12
          %v883 = vpop.permute.xlu0 %882
          %884 = vrot.lane.b32.xlu0 %v362, 12
          %v885 = vpop.permute.xlu0 %884
          %950 = vrot.lane.b32.xlu0 %v365, 16
          %v951 = vpop.permute.xlu0 %950
          %952 = vrot.lane.b32.xlu0 %v366, 16
          %v953 = vpop.permute.xlu0 %952
          %954 = vrot.lane.b32.xlu0 %v367, 16
          %v955 = vpop.permute.xlu0 %954
          %956 = vrot.lane.b32.xlu0 %v368, 16
          %v957 = vpop.permute.xlu0 %956
          %958 = vrot.lane.b32.xlu0 %v369, 16
          %v959 = vpop.permute.xlu0 %958
          %960 = vrot.lane.b32.xlu0 %v370, 16
          %v961 = vpop.permute.xlu0 %960
          %962 = vrot.lane.b32.xlu0 %v371, 16
          %v963 = vpop.permute.xlu0 %962
          %964 = vrot.lane.b32.xlu0 %v372, 16
          %v965 = vpop.permute.xlu0 %964
          %966 = vrot.lane.b32.xlu0 %v373, 16
          %v967 = vpop.permute.xlu0 %966
          %968 = vrot.lane.b32.xlu0 %v374, 16
          %v969 = vpop.permute.xlu0 %968
          %970 = vrot.lane.b32.xlu0 %v375, 16
          %v971 = vpop.permute.xlu0 %970
          %972 = vrot.lane.b32.xlu0 %v376, 16
          %v973 = vpop.permute.xlu0 %972
          %974 = vrot.lane.b32.xlu0 %v377, 16
          %v975 = vpop.permute.xlu0 %974
          %976 = vrot.lane.b32.xlu0 %v378, 16
          %v977 = vpop.permute.xlu0 %976
          %978 = vrot.lane.b32.xlu0 %v379, 16
          %v979 = vpop.permute.xlu0 %978
          %980 = vrot.lane.b32.xlu0 %v380, 16
          %v981 = vpop.permute.xlu0 %980
          %982 = vrot.lane.b32.xlu0 %v381, 16
          %v983 = vpop.permute.xlu0 %982
          %984 = vrot.lane.b32.xlu0 %v382, 16
          %v985 = vpop.permute.xlu0 %984
          %986 = vrot.lane.b32.xlu0 %v383, 16
          %v987 = vpop.permute.xlu0 %986
          %988 = vrot.lane.b32.xlu0 %v384, 16
          %v989 = vpop.permute.xlu0 %988
          %990 = vrot.lane.b32.xlu0 %v385, 16
          %v991 = vpop.permute.xlu0 %990
          %992 = vrot.lane.b32.xlu0 %v386, 16
          %v993 = vpop.permute.xlu0 %992
          %994 = vrot.lane.b32.xlu0 %v387, 16
          %v995 = vpop.permute.xlu0 %994
          %996 = vrot.lane.b32.xlu0 %v388, 16
          %v997 = vpop.permute.xlu0 %996
          %998 = vrot.lane.b32.xlu0 %v389, 16
          %v999 = vpop.permute.xlu0 %998
          %1000 = vrot.lane.b32.xlu0 %v390, 16
          %v1001 = vpop.permute.xlu0 %1000
          %1002 = vrot.lane.b32.xlu0 %v391, 16
          %v1003 = vpop.permute.xlu0 %1002
          %1004 = vrot.lane.b32.xlu0 %v392, 16
          %v1005 = vpop.permute.xlu0 %1004
          %1006 = vrot.lane.b32.xlu0 %v393, 16
          %v1007 = vpop.permute.xlu0 %1006
          %1008 = vrot.lane.b32.xlu0 %v394, 16
          %v1009 = vpop.permute.xlu0 %1008
          %1010 = vrot.lane.b32.xlu0 %v395, 16
          %v1011 = vpop.permute.xlu0 %1010
          %1012 = vrot.lane.b32.xlu0 %v396, 16
          %v1013 = vpop.permute.xlu0 %1012
          %1078 = vrot.lane.b32.xlu0 %v399, 20
          %v1079 = vpop.permute.xlu0 %1078
          %1080 = vrot.lane.b32.xlu0 %v400, 20
          %v1081 = vpop.permute.xlu0 %1080
          %1082 = vrot.lane.b32.xlu0 %v401, 20
          %v1083 = vpop.permute.xlu0 %1082
          %1084 = vrot.lane.b32.xlu0 %v402, 20
          %v1085 = vpop.permute.xlu0 %1084
          %1086 = vrot.lane.b32.xlu0 %v403, 20
          %v1087 = vpop.permute.xlu0 %1086
          %1088 = vrot.lane.b32.xlu0 %v404, 20
          %v1089 = vpop.permute.xlu0 %1088
          %1090 = vrot.lane.b32.xlu0 %v405, 20
          %v1091 = vpop.permute.xlu0 %1090
          %1092 = vrot.lane.b32.xlu0 %v406, 20
          %v1093 = vpop.permute.xlu0 %1092
          %1094 = vrot.lane.b32.xlu0 %v407, 20
          %v1095 = vpop.permute.xlu0 %1094
          %1096 = vrot.lane.b32.xlu0 %v408, 20
          %v1097 = vpop.permute.xlu0 %1096
          %1098 = vrot.lane.b32.xlu0 %v409, 20
          %v1099 = vpop.permute.xlu0 %1098
          %1100 = vrot.lane.b32.xlu0 %v410, 20
          %v1101 = vpop.permute.xlu0 %1100
          %1102 = vrot.lane.b32.xlu0 %v411, 20
          %v1103 = vpop.permute.xlu0 %1102
          %1104 = vrot.lane.b32.xlu0 %v412, 20
          %v1105 = vpop.permute.xlu0 %1104
          %1106 = vrot.lane.b32.xlu0 %v413, 20
          %v1107 = vpop.permute.xlu0 %1106
          %1108 = vrot.lane.b32.xlu0 %v414, 20
          %v1109 = vpop.permute.xlu0 %1108
          %1110 = vrot.lane.b32.xlu0 %v415, 20
          %v1111 = vpop.permute.xlu0 %1110
          %1112 = vrot.lane.b32.xlu0 %v416, 20
          %v1113 = vpop.permute.xlu0 %1112
          %1114 = vrot.lane.b32.xlu0 %v417, 20
          %v1115 = vpop.permute.xlu0 %1114
          %1116 = vrot.lane.b32.xlu0 %v418, 20
          %v1117 = vpop.permute.xlu0 %1116
          %1118 = vrot.lane.b32.xlu0 %v419, 20
          %v1119 = vpop.permute.xlu0 %1118
          %1120 = vrot.lane.b32.xlu0 %v420, 20
          %v1121 = vpop.permute.xlu0 %1120
          %1122 = vrot.lane.b32.xlu0 %v421, 20
          %v1123 = vpop.permute.xlu0 %1122
          %1124 = vrot.lane.b32.xlu0 %v422, 20
          %v1125 = vpop.permute.xlu0 %1124
          %1126 = vrot.lane.b32.xlu0 %v423, 20
          %v1127 = vpop.permute.xlu0 %1126
          %1128 = vrot.lane.b32.xlu0 %v424, 20
          %v1129 = vpop.permute.xlu0 %1128
          %1130 = vrot.lane.b32.xlu0 %v425, 20
          %v1131 = vpop.permute.xlu0 %1130
          %1132 = vrot.lane.b32.xlu0 %v426, 20
          %v1133 = vpop.permute.xlu0 %1132
          %1134 = vrot.lane.b32.xlu0 %v427, 20
          %v1135 = vpop.permute.xlu0 %1134
          %1136 = vrot.lane.b32.xlu0 %v428, 20
          %v1137 = vpop.permute.xlu0 %1136
          %1138 = vrot.lane.b32.xlu0 %v429, 20
          %v1139 = vpop.permute.xlu0 %1138
          %1140 = vrot.lane.b32.xlu0 %v430, 20
          %v1141 = vpop.permute.xlu0 %1140
          %1206 = vrot.lane.b32.xlu0 %v434, 24
          %v1207 = vpop.permute.xlu0 %1206
          %1208 = vrot.lane.b32.xlu0 %v435, 24
          %v1209 = vpop.permute.xlu0 %1208
          %1210 = vrot.lane.b32.xlu0 %v436, 24
          %v1211 = vpop.permute.xlu0 %1210
          %1212 = vrot.lane.b32.xlu0 %v437, 24
          %v1213 = vpop.permute.xlu0 %1212
          %1214 = vrot.lane.b32.xlu0 %v438, 24
          %v1215 = vpop.permute.xlu0 %1214
          %1216 = vrot.lane.b32.xlu0 %v439, 24
          %v1217 = vpop.permute.xlu0 %1216
          %1218 = vrot.lane.b32.xlu0 %v440, 24
          %v1219 = vpop.permute.xlu0 %1218
          %1220 = vrot.lane.b32.xlu0 %v441, 24
          %v1221 = vpop.permute.xlu0 %1220
          %1222 = vrot.lane.b32.xlu0 %v442, 24
          %v1223 = vpop.permute.xlu0 %1222
          %1224 = vrot.lane.b32.xlu0 %v443, 24
          %v1225 = vpop.permute.xlu0 %1224
          %1226 = vrot.lane.b32.xlu0 %v444, 24
          %v1227 = vpop.permute.xlu0 %1226
          %1228 = vrot.lane.b32.xlu0 %v445, 24
          %v1229 = vpop.permute.xlu0 %1228
          %1230 = vrot.lane.b32.xlu0 %v446, 24
          %v1231 = vpop.permute.xlu0 %1230
          %1232 = vrot.lane.b32.xlu0 %v447, 24
          %v1233 = vpop.permute.xlu0 %1232
          %1234 = vrot.lane.b32.xlu0 %v448, 24
          %v1235 = vpop.permute.xlu0 %1234
          %1236 = vrot.lane.b32.xlu0 %v449, 24
          %v1237 = vpop.permute.xlu0 %1236
          %1238 = vrot.lane.b32.xlu0 %v450, 24
          %v1239 = vpop.permute.xlu0 %1238
          %1240 = vrot.lane.b32.xlu0 %v451, 24
          %v1241 = vpop.permute.xlu0 %1240
          %1242 = vrot.lane.b32.xlu0 %v452, 24
          %v1243 = vpop.permute.xlu0 %1242
          %1244 = vrot.lane.b32.xlu0 %v453, 24
          %v1245 = vpop.permute.xlu0 %1244
          %1246 = vrot.lane.b32.xlu0 %v454, 24
          %v1247 = vpop.permute.xlu0 %1246
          %1248 = vrot.lane.b32.xlu0 %v455, 24
          %v1249 = vpop.permute.xlu0 %1248
          %1250 = vrot.lane.b32.xlu0 %v456, 24
          %v1251 = vpop.permute.xlu0 %1250
          %1252 = vrot.lane.b32.xlu0 %v457, 24
          %v1253 = vpop.permute.xlu0 %1252
          %1254 = vrot.lane.b32.xlu0 %v458, 24
          %v1255 = vpop.permute.xlu0 %1254
          %1256 = vrot.lane.b32.xlu0 %v459, 24
          %v1257 = vpop.permute.xlu0 %1256
          %1258 = vrot.lane.b32.xlu0 %v460, 24
          %v1259 = vpop.permute.xlu0 %1258
          %1260 = vrot.lane.b32.xlu0 %v461, 24
          %v1261 = vpop.permute.xlu0 %1260
          %1262 = vrot.lane.b32.xlu0 %v462, 24
          %v1263 = vpop.permute.xlu0 %1262
          %1264 = vrot.lane.b32.xlu0 %v463, 24
          %v1265 = vpop.permute.xlu0 %1264
          %1266 = vrot.lane.b32.xlu0 %v464, 24
          %v1267 = vpop.permute.xlu0 %1266
          %1268 = vrot.lane.b32.xlu0 %v465, 24
          %v1269 = vpop.permute.xlu0 %1268
          %1334 = vrot.lane.b32.xlu0 %v468, 28
          %v1335 = vpop.permute.xlu0 %1334
          %1336 = vrot.lane.b32.xlu0 %v469, 28
          %v1337 = vpop.permute.xlu0 %1336
          %1338 = vrot.lane.b32.xlu0 %v470, 28
          %v1339 = vpop.permute.xlu0 %1338
          %1340 = vrot.lane.b32.xlu0 %v471, 28
          %v1341 = vpop.permute.xlu0 %1340
          %1342 = vrot.lane.b32.xlu0 %v472, 28
          %v1343 = vpop.permute.xlu0 %1342
          %1344 = vrot.lane.b32.xlu0 %v473, 28
          %v1345 = vpop.permute.xlu0 %1344
          %1346 = vrot.lane.b32.xlu0 %v474, 28
          %v1347 = vpop.permute.xlu0 %1346
          %1348 = vrot.lane.b32.xlu0 %v475, 28
          %v1349 = vpop.permute.xlu0 %1348
          %1350 = vrot.lane.b32.xlu0 %v476, 28
          %v1351 = vpop.permute.xlu0 %1350
          %1352 = vrot.lane.b32.xlu0 %v477, 28
          %v1353 = vpop.permute.xlu0 %1352
          %1354 = vrot.lane.b32.xlu0 %v478, 28
          %v1355 = vpop.permute.xlu0 %1354
          %1356 = vrot.lane.b32.xlu0 %v479, 28
          %v1357 = vpop.permute.xlu0 %1356
          %1358 = vrot.lane.b32.xlu0 %v480, 28
          %v1359 = vpop.permute.xlu0 %1358
          %1360 = vrot.lane.b32.xlu0 %v481, 28
          %v1361 = vpop.permute.xlu0 %1360
          %1362 = vrot.lane.b32.xlu0 %v482, 28
          %v1363 = vpop.permute.xlu0 %1362
          %1364 = vrot.lane.b32.xlu0 %v483, 28
          %v1365 = vpop.permute.xlu0 %1364
          %1366 = vrot.lane.b32.xlu0 %v484, 28
          %v1367 = vpop.permute.xlu0 %1366
          %1368 = vrot.lane.b32.xlu0 %v485, 28
          %v1369 = vpop.permute.xlu0 %1368
          %1370 = vrot.lane.b32.xlu0 %v486, 28
          %v1371 = vpop.permute.xlu0 %1370
          %1372 = vrot.lane.b32.xlu0 %v487, 28
          %v1373 = vpop.permute.xlu0 %1372
          %1374 = vrot.lane.b32.xlu0 %v488, 28
          %v1375 = vpop.permute.xlu0 %1374
          %1376 = vrot.lane.b32.xlu0 %v489, 28
          %v1377 = vpop.permute.xlu0 %1376
          %1378 = vrot.lane.b32.xlu0 %v490, 28
          %v1379 = vpop.permute.xlu0 %1378
          %1380 = vrot.lane.b32.xlu0 %v491, 28
          %v1381 = vpop.permute.xlu0 %1380
          %1382 = vrot.lane.b32.xlu0 %v492, 28
          %v1383 = vpop.permute.xlu0 %1382
          %1384 = vrot.lane.b32.xlu0 %v493, 28
          %v1385 = vpop.permute.xlu0 %1384
          %1386 = vrot.lane.b32.xlu0 %v494, 28
          %v1387 = vpop.permute.xlu0 %1386
          %1388 = vrot.lane.b32.xlu0 %v495, 28
          %v1389 = vpop.permute.xlu0 %1388
          %1390 = vrot.lane.b32.xlu0 %v496, 28
          %v1391 = vpop.permute.xlu0 %1390
          %1392 = vrot.lane.b32.xlu0 %v497, 28
          %v1393 = vpop.permute.xlu0 %1392
          %1394 = vrot.lane.b32.xlu0 %v498, 28
          %v1395 = vpop.permute.xlu0 %1394
          %1396 = vrot.lane.b32.xlu0 %v499, 28
          %v1397 = vpop.permute.xlu0 %1396
          %1462 = vrot.lane.b32.xlu0 %v502, 32
          %v1463 = vpop.permute.xlu0 %1462
          %1464 = vrot.lane.b32.xlu0 %v503, 32
          %v1465 = vpop.permute.xlu0 %1464
          %1466 = vrot.lane.b32.xlu0 %v504, 32
          %v1467 = vpop.permute.xlu0 %1466
          %1468 = vrot.lane.b32.xlu0 %v505, 32
          %v1469 = vpop.permute.xlu0 %1468
          %1470 = vrot.lane.b32.xlu0 %v506, 32
          %v1471 = vpop.permute.xlu0 %1470
          %1472 = vrot.lane.b32.xlu0 %v507, 32
          %v1473 = vpop.permute.xlu0 %1472
          %1474 = vrot.lane.b32.xlu0 %v508, 32
          %v1475 = vpop.permute.xlu0 %1474
          %1476 = vrot.lane.b32.xlu0 %v509, 32
          %v1477 = vpop.permute.xlu0 %1476
          %1478 = vrot.lane.b32.xlu0 %v510, 32
          %v1479 = vpop.permute.xlu0 %1478
          %1480 = vrot.lane.b32.xlu0 %v511, 32
          %v1481 = vpop.permute.xlu0 %1480
          %1482 = vrot.lane.b32.xlu0 %v512, 32
          %v1483 = vpop.permute.xlu0 %1482
          %1484 = vrot.lane.b32.xlu0 %v513, 32
          %v1485 = vpop.permute.xlu0 %1484
          %1486 = vrot.lane.b32.xlu0 %v514, 32
          %v1487 = vpop.permute.xlu0 %1486
          %1488 = vrot.lane.b32.xlu0 %v515, 32
          %v1489 = vpop.permute.xlu0 %1488
          %1490 = vrot.lane.b32.xlu0 %v516, 32
          %v1491 = vpop.permute.xlu0 %1490
          %1492 = vrot.lane.b32.xlu0 %v517, 32
          %v1493 = vpop.permute.xlu0 %1492
          %1494 = vrot.lane.b32.xlu0 %v518, 32
          %v1495 = vpop.permute.xlu0 %1494
          %1496 = vrot.lane.b32.xlu0 %v519, 32
          %v1497 = vpop.permute.xlu0 %1496
          %1498 = vrot.lane.b32.xlu0 %v520, 32
          %v1499 = vpop.permute.xlu0 %1498
          %1500 = vrot.lane.b32.xlu0 %v521, 32
          %v1501 = vpop.permute.xlu0 %1500
          %1502 = vrot.lane.b32.xlu0 %v522, 32
          %v1503 = vpop.permute.xlu0 %1502
          %1504 = vrot.lane.b32.xlu0 %v523, 32
          %v1505 = vpop.permute.xlu0 %1504
          %1506 = vrot.lane.b32.xlu0 %v524, 32
          %v1507 = vpop.permute.xlu0 %1506
          %1508 = vrot.lane.b32.xlu0 %v525, 32
          %v1509 = vpop.permute.xlu0 %1508
          %1510 = vrot.lane.b32.xlu0 %v526, 32
          %v1511 = vpop.permute.xlu0 %1510
          %1512 = vrot.lane.b32.xlu0 %v527, 32
          %v1513 = vpop.permute.xlu0 %1512
          %1514 = vrot.lane.b32.xlu0 %v528, 32
          %v1515 = vpop.permute.xlu0 %1514
          %1516 = vrot.lane.b32.xlu0 %v529, 32
          %v1517 = vpop.permute.xlu0 %1516
          %1518 = vrot.lane.b32.xlu0 %v530, 32
          %v1519 = vpop.permute.xlu0 %1518
          %1520 = vrot.lane.b32.xlu0 %v531, 32
          %v1521 = vpop.permute.xlu0 %1520
          %1522 = vrot.lane.b32.xlu0 %v532, 32
          %v1523 = vpop.permute.xlu0 %1522
          %1524 = vrot.lane.b32.xlu0 %v533, 32
          %v1525 = vpop.permute.xlu0 %1524
          %vm1558 = vcmask 31744
          %v1559 = vsel %vm1558, %v228, %v567
          %v1560 = vsel %vm1558, %v229, %v569
          %v1561 = vsel %vm1558, %v230, %v571
          %v1562 = vsel %vm1558, %v231, %v573
          %v1563 = vsel %vm1558, %v232, %v575
          %v1564 = vsel %vm1558, %v233, %v577
          %v1565 = vsel %vm1558, %v234, %v579
          %v1566 = vsel %vm1558, %v235, %v581
          %v1567 = vsel %vm1558, %v236, %v583
          %v1568 = vsel %vm1558, %v237, %v585
          %v1569 = vsel %vm1558, %v238, %v587
          %v1570 = vsel %vm1558, %v239, %v589
          %v1571 = vsel %vm1558, %v240, %v591
          %v1572 = vsel %vm1558, %v241, %v593
          %v1573 = vsel %vm1558, %v242, %v595
          %v1574 = vsel %vm1558, %v243, %v597
          %v1575 = vsel %vm1558, %v244, %v599
          %v1576 = vsel %vm1558, %v245, %v601
          %v1577 = vsel %vm1558, %v246, %v603
          %v1578 = vsel %vm1558, %v247, %v605
          %v1579 = vsel %vm1558, %v248, %v607
          %v1580 = vsel %vm1558, %v249, %v609
          %v1581 = vsel %vm1558, %v250, %v611
          %v1582 = vsel %vm1558, %v251, %v613
          %v1583 = vsel %vm1558, %v252, %v615
          %v1584 = vsel %vm1558, %v253, %v617
          %v1585 = vsel %vm1558, %v254, %v619
          %v1586 = vsel %vm1558, %v255, %v621
          %v1587 = vsel %vm1558, %v256, %v623
          %v1588 = vsel %vm1558, %v257, %v625
          %v1589 = vsel %vm1558, %v258, %v627
          %v1590 = vsel %vm1558, %v259, %v629
          %vm1591 = vcmask 64512
          %v1592 = vsel %vm1591, %v1559, %v695
          %v1593 = vsel %vm1591, %v1560, %v697
          %v1594 = vsel %vm1591, %v1561, %v699
          %v1595 = vsel %vm1591, %v1562, %v701
          %v1596 = vsel %vm1591, %v1563, %v703
          %v1597 = vsel %vm1591, %v1564, %v705
          %v1598 = vsel %vm1591, %v1565, %v707
          %v1599 = vsel %vm1591, %v1566, %v709
          %v1600 = vsel %vm1591, %v1567, %v711
          %v1601 = vsel %vm1591, %v1568, %v713
          %v1602 = vsel %vm1591, %v1569, %v715
          %v1603 = vsel %vm1591, %v1570, %v717
          %v1604 = vsel %vm1591, %v1571, %v719
          %v1605 = vsel %vm1591, %v1572, %v721
          %v1606 = vsel %vm1591, %v1573, %v723
          %v1607 = vsel %vm1591, %v1574, %v725
          %v1608 = vsel %vm1591, %v1575, %v727
          %v1609 = vsel %vm1591, %v1576, %v729
          %v1610 = vsel %vm1591, %v1577, %v731
          %v1611 = vsel %vm1591, %v1578, %v733
          %v1612 = vsel %vm1591, %v1579, %v735
          %v1613 = vsel %vm1591, %v1580, %v737
          %v1614 = vsel %vm1591, %v1581, %v739
          %v1615 = vsel %vm1591, %v1582, %v741
          %v1616 = vsel %vm1591, %v1583, %v743
          %v1617 = vsel %vm1591, %v1584, %v745
          %v1618 = vsel %vm1591, %v1585, %v747
          %v1619 = vsel %vm1591, %v1586, %v749
          %v1620 = vsel %vm1591, %v1587, %v751
          %v1621 = vsel %vm1591, %v1588, %v753
          %v1622 = vsel %vm1591, %v1589, %v755
          %v1623 = vsel %vm1591, %v1590, %v757
          %vm1624 = vcmask 97280
          %v1625 = vsel %vm1624, %v1592, %v823
          %v1626 = vsel %vm1624, %v1593, %v825
          %v1627 = vsel %vm1624, %v1594, %v827
          %v1628 = vsel %vm1624, %v1595, %v829
          %v1629 = vsel %vm1624, %v1596, %v831
          %v1630 = vsel %vm1624, %v1597, %v833
          %v1631 = vsel %vm1624, %v1598, %v835
          %v1632 = vsel %vm1624, %v1599, %v837
          %v1633 = vsel %vm1624, %v1600, %v839
          %v1634 = vsel %vm1624, %v1601, %v841
          %v1635 = vsel %vm1624, %v1602, %v843
          %v1636 = vsel %vm1624, %v1603, %v845
          %v1637 = vsel %vm1624, %v1604, %v847
          %v1638 = vsel %vm1624, %v1605, %v849
          %v1639 = vsel %vm1624, %v1606, %v851
          %v1640 = vsel %vm1624, %v1607, %v853
          %v1641 = vsel %vm1624, %v1608, %v855
          %v1642 = vsel %vm1624, %v1609, %v857
          %v1643 = vsel %vm1624, %v1610, %v859
          %v1644 = vsel %vm1624, %v1611, %v861
          %v1645 = vsel %vm1624, %v1612, %v863
          %v1646 = vsel %vm1624, %v1613, %v865
          %v1647 = vsel %vm1624, %v1614, %v867
          %v1648 = vsel %vm1624, %v1615, %v869
          %v1649 = vsel %vm1624, %v1616, %v871
          %v1650 = vsel %vm1624, %v1617, %v873
          %v1651 = vsel %vm1624, %v1618, %v875
          %v1652 = vsel %vm1624, %v1619, %v877
          %v1653 = vsel %vm1624, %v1620, %v879
          %v1654 = vsel %vm1624, %v1621, %v881
          %v1655 = vsel %vm1624, %v1622, %v883
          %v1656 = vsel %vm1624, %v1623, %v885
          %vm1657 = vcmask 130048
          %v1658 = vsel %vm1657, %v1625, %v951
          %v1659 = vsel %vm1657, %v1626, %v953
          %v1660 = vsel %vm1657, %v1627, %v955
          %v1661 = vsel %vm1657, %v1628, %v957
          %v1662 = vsel %vm1657, %v1629, %v959
          %v1663 = vsel %vm1657, %v1630, %v961
          %v1664 = vsel %vm1657, %v1631, %v963
          %v1665 = vsel %vm1657, %v1632, %v965
          %v1666 = vsel %vm1657, %v1633, %v967
          %v1667 = vsel %vm1657, %v1634, %v969
          %v1668 = vsel %vm1657, %v1635, %v971
          %v1669 = vsel %vm1657, %v1636, %v973
          %v1670 = vsel %vm1657, %v1637, %v975
          %v1671 = vsel %vm1657, %v1638, %v977
          %v1672 = vsel %vm1657, %v1639, %v979
          %v1673 = vsel %vm1657, %v1640, %v981
          %v1674 = vsel %vm1657, %v1641, %v983
          %v1675 = vsel %vm1657, %v1642, %v985
          %v1676 = vsel %vm1657, %v1643, %v987
          %v1677 = vsel %vm1657, %v1644, %v989
          %v1678 = vsel %vm1657, %v1645, %v991
          %v1679 = vsel %vm1657, %v1646, %v993
          %v1680 = vsel %vm1657, %v1647, %v995
          %v1681 = vsel %vm1657, %v1648, %v997
          %v1682 = vsel %vm1657, %v1649, %v999
          %v1683 = vsel %vm1657, %v1650, %v1001
          %v1684 = vsel %vm1657, %v1651, %v1003
          %v1685 = vsel %vm1657, %v1652, %v1005
          %v1686 = vsel %vm1657, %v1653, %v1007
          %v1687 = vsel %vm1657, %v1654, %v1009
          %v1688 = vsel %vm1657, %v1655, %v1011
          %v1689 = vsel %vm1657, %v1656, %v1013
          %vm1690 = vcmask 162816
          %v1691 = vsel %vm1690, %v1658, %v1079
          %v1692 = vsel %vm1690, %v1659, %v1081
          %v1693 = vsel %vm1690, %v1660, %v1083
          %v1694 = vsel %vm1690, %v1661, %v1085
          %v1695 = vsel %vm1690, %v1662, %v1087
          %v1696 = vsel %vm1690, %v1663, %v1089
          %v1697 = vsel %vm1690, %v1664, %v1091
          %v1698 = vsel %vm1690, %v1665, %v1093
          %v1699 = vsel %vm1690, %v1666, %v1095
          %v1700 = vsel %vm1690, %v1667, %v1097
          %v1701 = vsel %vm1690, %v1668, %v1099
          %v1702 = vsel %vm1690, %v1669, %v1101
          %v1703 = vsel %vm1690, %v1670, %v1103
          %v1704 = vsel %vm1690, %v1671, %v1105
          %v1705 = vsel %vm1690, %v1672, %v1107
          %v1706 = vsel %vm1690, %v1673, %v1109
          %v1707 = vsel %vm1690, %v1674, %v1111
          %v1708 = vsel %vm1690, %v1675, %v1113
          %v1709 = vsel %vm1690, %v1676, %v1115
          %v1710 = vsel %vm1690, %v1677, %v1117
          %v1711 = vsel %vm1690, %v1678, %v1119
          %v1712 = vsel %vm1690, %v1679, %v1121
          %v1713 = vsel %vm1690, %v1680, %v1123
          %v1714 = vsel %vm1690, %v1681, %v1125
          %v1715 = vsel %vm1690, %v1682, %v1127
          %v1716 = vsel %vm1690, %v1683, %v1129
          %v1717 = vsel %vm1690, %v1684, %v1131
          %v1718 = vsel %vm1690, %v1685, %v1133
          %v1719 = vsel %vm1690, %v1686, %v1135
          %v1720 = vsel %vm1690, %v1687, %v1137
          %v1721 = vsel %vm1690, %v1688, %v1139
          %v1722 = vsel %vm1690, %v1689, %v1141
          %vm1723 = vcmask 195584
          %v1724 = vsel %vm1723, %v1691, %v1207
          %v1725 = vsel %vm1723, %v1692, %v1209
          %v1726 = vsel %vm1723, %v1693, %v1211
          %v1727 = vsel %vm1723, %v1694, %v1213
          %v1728 = vsel %vm1723, %v1695, %v1215
          %v1729 = vsel %vm1723, %v1696, %v1217
          %v1730 = vsel %vm1723, %v1697, %v1219
          %v1731 = vsel %vm1723, %v1698, %v1221
          %v1732 = vsel %vm1723, %v1699, %v1223
          %v1733 = vsel %vm1723, %v1700, %v1225
          %v1734 = vsel %vm1723, %v1701, %v1227
          %v1735 = vsel %vm1723, %v1702, %v1229
          %v1736 = vsel %vm1723, %v1703, %v1231
          %v1737 = vsel %vm1723, %v1704, %v1233
          %v1738 = vsel %vm1723, %v1705, %v1235
          %v1739 = vsel %vm1723, %v1706, %v1237
          %v1740 = vsel %vm1723, %v1707, %v1239
          %v1741 = vsel %vm1723, %v1708, %v1241
          %v1742 = vsel %vm1723, %v1709, %v1243
          %v1743 = vsel %vm1723, %v1710, %v1245
          %v1744 = vsel %vm1723, %v1711, %v1247
          %v1745 = vsel %vm1723, %v1712, %v1249
          %v1746 = vsel %vm1723, %v1713, %v1251
          %v1747 = vsel %vm1723, %v1714, %v1253
          %v1748 = vsel %vm1723, %v1715, %v1255
          %v1749 = vsel %vm1723, %v1716, %v1257
          %v1750 = vsel %vm1723, %v1717, %v1259
          %v1751 = vsel %vm1723, %v1718, %v1261
          %v1752 = vsel %vm1723, %v1719, %v1263
          %v1753 = vsel %vm1723, %v1720, %v1265
          %v1754 = vsel %vm1723, %v1721, %v1267
          %v1755 = vsel %vm1723, %v1722, %v1269
          %vm1756 = vcmask 228352
          %v1757 = vsel %vm1756, %v1724, %v1335
          %v1758 = vsel %vm1756, %v1725, %v1337
          %v1759 = vsel %vm1756, %v1726, %v1339
          %v1760 = vsel %vm1756, %v1727, %v1341
          %v1761 = vsel %vm1756, %v1728, %v1343
          %v1762 = vsel %vm1756, %v1729, %v1345
          %v1763 = vsel %vm1756, %v1730, %v1347
          %v1764 = vsel %vm1756, %v1731, %v1349
          %v1765 = vsel %vm1756, %v1732, %v1351
          %v1766 = vsel %vm1756, %v1733, %v1353
          %v1767 = vsel %vm1756, %v1734, %v1355
          %v1768 = vsel %vm1756, %v1735, %v1357
          %v1769 = vsel %vm1756, %v1736, %v1359
          %v1770 = vsel %vm1756, %v1737, %v1361
          %v1771 = vsel %vm1756, %v1738, %v1363
          %v1772 = vsel %vm1756, %v1739, %v1365
          %v1773 = vsel %vm1756, %v1740, %v1367
          %v1774 = vsel %vm1756, %v1741, %v1369
          %v1775 = vsel %vm1756, %v1742, %v1371
          %v1776 = vsel %vm1756, %v1743, %v1373
          %v1777 = vsel %vm1756, %v1744, %v1375
          %v1778 = vsel %vm1756, %v1745, %v1377
          %v1779 = vsel %vm1756, %v1746, %v1379
          %v1780 = vsel %vm1756, %v1747, %v1381
          %v1781 = vsel %vm1756, %v1748, %v1383
          %v1782 = vsel %vm1756, %v1749, %v1385
          %v1783 = vsel %vm1756, %v1750, %v1387
          %v1784 = vsel %vm1756, %v1751, %v1389
          %v1785 = vsel %vm1756, %v1752, %v1391
          %v1786 = vsel %vm1756, %v1753, %v1393
          %v1787 = vsel %vm1756, %v1754, %v1395
          %v1788 = vsel %vm1756, %v1755, %v1397
          %vm1789 = vcmask 261120
          %v1790 = vsel %vm1789, %v1757, %v1463
          %v1791 = vsel %vm1789, %v1758, %v1465
          %v1792 = vsel %vm1789, %v1759, %v1467
          %v1793 = vsel %vm1789, %v1760, %v1469
          %v1794 = vsel %vm1789, %v1761, %v1471
          %v1795 = vsel %vm1789, %v1762, %v1473
          %v1796 = vsel %vm1789, %v1763, %v1475
          %v1797 = vsel %vm1789, %v1764, %v1477
          %v1798 = vsel %vm1789, %v1765, %v1479
          %v1799 = vsel %vm1789, %v1766, %v1481
          %v1800 = vsel %vm1789, %v1767, %v1483
          %v1801 = vsel %vm1789, %v1768, %v1485
          %v1802 = vsel %vm1789, %v1769, %v1487
          %v1803 = vsel %vm1789, %v1770, %v1489
          %v1804 = vsel %vm1789, %v1771, %v1491
          %v1805 = vsel %vm1789, %v1772, %v1493
          %v1806 = vsel %vm1789, %v1773, %v1495
          %v1807 = vsel %vm1789, %v1774, %v1497
          %v1808 = vsel %vm1789, %v1775, %v1499
          %v1809 = vsel %vm1789, %v1776, %v1501
          %v1810 = vsel %vm1789, %v1777, %v1503
          %v1811 = vsel %vm1789, %v1778, %v1505
          %v1812 = vsel %vm1789, %v1779, %v1507
          %v1813 = vsel %vm1789, %v1780, %v1509
          %v1814 = vsel %vm1789, %v1781, %v1511
          %v1815 = vsel %vm1789, %v1782, %v1513
          %v1816 = vsel %vm1789, %v1783, %v1515
          %v1817 = vsel %vm1789, %v1784, %v1517
          %v1818 = vsel %vm1789, %v1785, %v1519
          %v1819 = vsel %vm1789, %v1786, %v1521
          %v1820 = vsel %vm1789, %v1787, %v1523
          %v1821 = vsel %vm1789, %v1788, %v1525
          %vm1822 = vcmask 293888
          %v1824 = vsel %vm1822, %v1790, 0
          %v1827 = vsel %vm1822, %v1791, 0
          %v1830 = vsel %vm1822, %v1792, 0
          %v1833 = vsel %vm1822, %v1793, 0
          %v1836 = vsel %vm1822, %v1794, 0
          %v1839 = vsel %vm1822, %v1795, 0
          %v1842 = vsel %vm1822, %v1796, 0
          %v1845 = vsel %vm1822, %v1797, 0
          %v1848 = vsel %vm1822, %v1798, 0
          %v1851 = vsel %vm1822, %v1799, 0
          %v1854 = vsel %vm1822, %v1800, 0
          %v1857 = vsel %vm1822, %v1801, 0
          %v1860 = vsel %vm1822, %v1802, 0
          %v1863 = vsel %vm1822, %v1803, 0
          %v1866 = vsel %vm1822, %v1804, 0
          %v1869 = vsel %vm1822, %v1805, 0
          %v1872 = vsel %vm1822, %v1806, 0
          %v1875 = vsel %vm1822, %v1807, 0
          %v1878 = vsel %vm1822, %v1808, 0
          %v1881 = vsel %vm1822, %v1809, 0
          %v1884 = vsel %vm1822, %v1810, 0
          %v1887 = vsel %vm1822, %v1811, 0
          %v1890 = vsel %vm1822, %v1812, 0
          %v1893 = vsel %vm1822, %v1813, 0
          %v1896 = vsel %vm1822, %v1814, 0
          %v1899 = vsel %vm1822, %v1815, 0
          %v1902 = vsel %vm1822, %v1816, 0
          %v1905 = vsel %vm1822, %v1817, 0
          %v1908 = vsel %vm1822, %v1818, 0
          %v1911 = vsel %vm1822, %v1819, 0
          %v1914 = vsel %vm1822, %v1820, 0
          %v1917 = vsel %vm1822, %v1821, 0
          %vm1919 = vcmask 1043456
          %v1921 = vsel %vm1919, %v218, 0
          %1923 = vmatpush.msra.mxu0 0.0
          %1924 = vmatpush.msra.mxu0 0.0
          %1925 = vmatpush.msra.mxu0 0.0
          %1926 = vmatpush.msra.mxu0 0.0
          %1927 = vmatpush.msra.mxu0 0.0
          %1928 = vmatpush.msra.mxu0 0.0
          %1929 = vmatpush.msra.mxu0 0.0
          %1930 = vmatpush.msra.mxu0 0.0
          %1931 = vmatpush.msra.mxu0 0.0
          %1932 = vmatpush.msra.mxu0 0.0
          %1933 = vmatpush.msra.mxu0 0.0
          %1934 = vmatpush.msra.mxu0 %v1921
          %1935 = vmatpush.msra.mxu0 %v217
          %1936 = vmatpush.msra.mxu0 %v216
          %1937 = vmatpush.msra.mxu0 %v215
          %1938 = vmatpush.msra.mxu0 %v214
          %1939 = vmatmul.f32.gmra.mxu0 %v1824
          %v1940 = vpop.f32.mrf.mxu0
          %v1941 = vadd.f32 0.0, %v1940
          %1942 = vmatmul.f32.gmra.mxu0 %v1827
          %v1943 = vpop.f32.mrf.mxu0
          %v1944 = vadd.f32 0.0, %v1943
          %1945 = vmatmul.f32.gmra.mxu0 %v1830
          %v1946 = vpop.f32.mrf.mxu0
          %v1947 = vadd.f32 0.0, %v1946
          %1948 = vmatmul.f32.gmra.mxu0 %v1833
          %v1949 = vpop.f32.mrf.mxu0
          %v1950 = vadd.f32 0.0, %v1949
          %1951 = vmatmul.f32.gmra.mxu0 %v1836
          %v1952 = vpop.f32.mrf.mxu0
          %v1953 = vadd.f32 0.0, %v1952
          %1954 = vmatmul.f32.gmra.mxu0 %v1839
          %v1955 = vpop.f32.mrf.mxu0
          %v1956 = vadd.f32 0.0, %v1955
          %1957 = vmatmul.f32.gmra.mxu0 %v1842
          %v1958 = vpop.f32.mrf.mxu0
          %v1959 = vadd.f32 0.0, %v1958
          %1960 = vmatmul.f32.gmra.mxu0 %v1845
          %v1961 = vpop.f32.mrf.mxu0
          %v1962 = vadd.f32 0.0, %v1961
          %1963 = vmatmul.f32.gmra.mxu0 %v1848
          %v1964 = vpop.f32.mrf.mxu0
          %v1965 = vadd.f32 0.0, %v1964
          %1966 = vmatmul.f32.gmra.mxu0 %v1851
          %v1967 = vpop.f32.mrf.mxu0
          %v1968 = vadd.f32 0.0, %v1967
          %1969 = vmatmul.f32.gmra.mxu0 %v1854
          %v1970 = vpop.f32.mrf.mxu0
          %v1971 = vadd.f32 0.0, %v1970
          %1972 = vmatmul.f32.gmra.mxu0 %v1857
          %v1973 = vpop.f32.mrf.mxu0
          %v1974 = vadd.f32 0.0, %v1973
          %1975 = vmatmul.f32.gmra.mxu0 %v1860
          %v1976 = vpop.f32.mrf.mxu0
          %v1977 = vadd.f32 0.0, %v1976
          %1978 = vmatmul.f32.gmra.mxu0 %v1863
          %v1979 = vpop.f32.mrf.mxu0
          %v1980 = vadd.f32 0.0, %v1979
          %1981 = vmatmul.f32.gmra.mxu0 %v1866
          %v1982 = vpop.f32.mrf.mxu0
          %v1983 = vadd.f32 0.0, %v1982
          %1984 = vmatmul.f32.gmra.mxu0 %v1869
          %v1985 = vpop.f32.mrf.mxu0
          %v1986 = vadd.f32 0.0, %v1985
          %1987 = vmatmul.f32.gmra.mxu0 %v1872
          %v1988 = vpop.f32.mrf.mxu0
          %v1989 = vadd.f32 0.0, %v1988
          %1990 = vmatmul.f32.gmra.mxu0 %v1875
          %v1991 = vpop.f32.mrf.mxu0
          %v1992 = vadd.f32 0.0, %v1991
          %1993 = vmatmul.f32.gmra.mxu0 %v1878
          %v1994 = vpop.f32.mrf.mxu0
          %v1995 = vadd.f32 0.0, %v1994
          %1996 = vmatmul.f32.gmra.mxu0 %v1881
          %v1997 = vpop.f32.mrf.mxu0
          %v1998 = vadd.f32 0.0, %v1997
          %1999 = vmatmul.f32.gmra.mxu0 %v1884
          %v2000 = vpop.f32.mrf.mxu0
          %v2001 = vadd.f32 0.0, %v2000
          %2002 = vmatmul.f32.gmra.mxu0 %v1887
          %v2003 = vpop.f32.mrf.mxu0
          %v2004 = vadd.f32 0.0, %v2003
          %2005 = vmatmul.f32.gmra.mxu0 %v1890
          %v2006 = vpop.f32.mrf.mxu0
          %v2007 = vadd.f32 0.0, %v2006
          %2008 = vmatmul.f32.gmra.mxu0 %v1893
          %v2009 = vpop.f32.mrf.mxu0
          %v2010 = vadd.f32 0.0, %v2009
          %2011 = vmatmul.f32.gmra.mxu0 %v1896
          %v2012 = vpop.f32.mrf.mxu0
          %v2013 = vadd.f32 0.0, %v2012
          %2014 = vmatmul.f32.gmra.mxu0 %v1899
          %v2015 = vpop.f32.mrf.mxu0
          %v2016 = vadd.f32 0.0, %v2015
          %2017 = vmatmul.f32.gmra.mxu0 %v1902
          %v2018 = vpop.f32.mrf.mxu0
          %v2019 = vadd.f32 0.0, %v2018
          %2020 = vmatmul.f32.gmra.mxu0 %v1905
          %v2021 = vpop.f32.mrf.mxu0
          %v2022 = vadd.f32 0.0, %v2021
          %2023 = vmatmul.f32.gmra.mxu0 %v1908
          %v2024 = vpop.f32.mrf.mxu0
          %v2025 = vadd.f32 0.0, %v2024
          %2026 = vmatmul.f32.gmra.mxu0 %v1911
          %v2027 = vpop.f32.mrf.mxu0
          %v2028 = vadd.f32 0.0, %v2027
          %2029 = vmatmul.f32.gmra.mxu0 %v1914
          %v2030 = vpop.f32.mrf.mxu0
          %v2031 = vadd.f32 0.0, %v2030
          %2032 = vmatmul.f32.gmra.mxu0 %v1917
          %v2033 = vpop.f32.mrf.mxu0
          %v2034 = vadd.f32 0.0, %v2033
          %2035 = vdwg.mxu0
          %s2036 = smul.u32 %s225, 64
          %s2037 = scalar_lea.vmem %s194, %s2036 [#allocation2]
          %2038 = vst [vmem:[%s2037] sm:$0xff] %v1941
          %2039 = vst [vmem:[%s2037 + $0x8] sm:$0xff] %v1944
          %2040 = vst [vmem:[%s2037 + $0x10] sm:$0xff] %v1947
          %2041 = vst [vmem:[%s2037 + $0x18] sm:$0xff] %v1950
          %2042 = vst [vmem:[%s2037 + $0x20] sm:$0xff] %v1953
          %2043 = vst [vmem:[%s2037 + $0x28] sm:$0xff] %v1956
          %2044 = vst [vmem:[%s2037 + $0x30] sm:$0xff] %v1959
          %2045 = vst [vmem:[%s2037 + $0x38] sm:$0xff] %v1962
          %2046 = vst [vmem:[%s2037 + $0x40] sm:$0xff] %v1965
          %2047 = vst [vmem:[%s2037 + $0x48] sm:$0xff] %v1968
          %2048 = vst [vmem:[%s2037 + $0x50] sm:$0xff] %v1971
          %2049 = vst [vmem:[%s2037 + $0x58] sm:$0xff] %v1974
          %2050 = vst [vmem:[%s2037 + $0x60] sm:$0xff] %v1977
          %2051 = vst [vmem:[%s2037 + $0x68] sm:$0xff] %v1980
          %2052 = vst [vmem:[%s2037 + $0x70] sm:$0xff] %v1983
          %2053 = vst [vmem:[%s2037 + $0x78] sm:$0xff] %v1986
          %2054 = vst [vmem:[%s2037 + $0x80] sm:$0xff] %v1989
          %2055 = vst [vmem:[%s2037 + $0x88] sm:$0xff] %v1992
          %2056 = vst [vmem:[%s2037 + $0x90] sm:$0xff] %v1995
          %2057 = vst [vmem:[%s2037 + $0x98] sm:$0xff] %v1998
          %2058 = vst [vmem:[%s2037 + $0xa0] sm:$0xff] %v2001
          %2059 = vst [vmem:[%s2037 + $0xa8] sm:$0xff] %v2004
          %2060 = vst [vmem:[%s2037 + $0xb0] sm:$0xff] %v2007
          %2061 = vst [vmem:[%s2037 + $0xb8] sm:$0xff] %v2010
          %2062 = vst [vmem:[%s2037 + $0xc0] sm:$0xff] %v2013
          %2063 = vst [vmem:[%s2037 + $0xc8] sm:$0xff] %v2016
          %2064 = vst [vmem:[%s2037 + $0xd0] sm:$0xff] %v2019
          %2065 = vst [vmem:[%s2037 + $0xd8] sm:$0xff] %v2022
          %2066 = vst [vmem:[%s2037 + $0xe0] sm:$0xff] %v2025
          %2067 = vst [vmem:[%s2037 + $0xe8] sm:$0xff] %v2028
          %2068 = vst [vmem:[%s2037 + $0xf0] sm:$0xff] %v2031
          %2069 = vst [vmem:[%s2037 + $0xf8] sm:$0xff] %v2034
          %v2070 = vld [vmem:[%s200] sm:$0x1]
          %v2071 = vadd.f32 %v1941, %v1944
          %v2072 = vadd.f32 %v2071, %v1947
          %v2073 = vadd.f32 %v2072, %v1950
          %v2074 = vadd.f32 %v2073, %v1953
          %v2075 = vadd.f32 %v2074, %v1956
          %v2076 = vadd.f32 %v2075, %v1959
          %v2077 = vadd.f32 %v2076, %v1962
          %v2078 = vadd.f32 %v2077, %v1965
          %v2079 = vadd.f32 %v2078, %v1968
          %v2080 = vadd.f32 %v2079, %v1971
          %v2081 = vadd.f32 %v2080, %v1974
          %v2082 = vadd.f32 %v2081, %v1977
          %v2083 = vadd.f32 %v2082, %v1980
          %v2084 = vadd.f32 %v2083, %v1983
          %v2085 = vadd.f32 %v2084, %v1986
          %v2086 = vadd.f32 %v2085, %v1989
          %v2087 = vadd.f32 %v2086, %v1992
          %v2088 = vadd.f32 %v2087, %v1995
          %v2089 = vadd.f32 %v2088, %v1998
          %v2090 = vadd.f32 %v2089, %v2001
          %v2091 = vadd.f32 %v2090, %v2004
          %v2092 = vadd.f32 %v2091, %v2007
          %v2093 = vadd.f32 %v2092, %v2010
          %v2094 = vadd.f32 %v2093, %v2013
          %v2095 = vadd.f32 %v2094, %v2016
          %v2096 = vadd.f32 %v2095, %v2019
          %v2097 = vadd.f32 %v2096, %v2022
          %v2098 = vadd.f32 %v2097, %v2025
          %v2099 = vadd.f32 %v2098, %v2028
          %v2100 = vadd.f32 %v2099, %v2031
          %v2101 = vadd.f32 %v2100, %v2034
          %v2102 = vrot.slane %v2101, 4
          %v2103 = vadd.f32 %v2101, %v2102
          %v2104 = vrot.slane %v2103, 2
          %v2105 = vadd.f32 %v2103, %v2104
          %v2106 = vrot.slane %v2105, 1
          %v2107 = vadd.f32 %v2105, %v2106
          %v2108 = vadd.f32 %v2070, %v2107
          %2109 = vst [vmem:[%s200] sm:$0x1] %v2108
          %v2110 = vld [vmem:[%s206] sm:$0x1]
          %v2111 = vmul.f32 %v1941, %v1941
          %v2112 = vmul.f32 %v1944, %v1944
          %v2113 = vmul.f32 %v1947, %v1947
          %v2114 = vmul.f32 %v1950, %v1950
          %v2115 = vmul.f32 %v1953, %v1953
          %v2116 = vmul.f32 %v1956, %v1956
          %v2117 = vmul.f32 %v1959, %v1959
          %v2118 = vmul.f32 %v1962, %v1962
          %v2119 = vmul.f32 %v1965, %v1965
          %v2120 = vmul.f32 %v1968, %v1968
          %v2121 = vmul.f32 %v1971, %v1971
          %v2122 = vmul.f32 %v1974, %v1974
          %v2123 = vmul.f32 %v1977, %v1977
          %v2124 = vmul.f32 %v1980, %v1980
          %v2125 = vmul.f32 %v1983, %v1983
          %v2126 = vmul.f32 %v1986, %v1986
          %v2127 = vmul.f32 %v1989, %v1989
          %v2128 = vmul.f32 %v1992, %v1992
          %v2129 = vmul.f32 %v1995, %v1995
          %v2130 = vmul.f32 %v1998, %v1998
          %v2131 = vmul.f32 %v2001, %v2001
          %v2132 = vmul.f32 %v2004, %v2004
          %v2133 = vmul.f32 %v2007, %v2007
          %v2134 = vmul.f32 %v2010, %v2010
          %v2135 = vmul.f32 %v2013, %v2013
          %v2136 = vmul.f32 %v2016, %v2016
          %v2137 = vmul.f32 %v2019, %v2019
          %v2138 = vmul.f32 %v2022, %v2022
          %v2139 = vmul.f32 %v2025, %v2025
          %v2140 = vmul.f32 %v2028, %v2028
          %v2141 = vmul.f32 %v2031, %v2031
          %v2142 = vmul.f32 %v2034, %v2034
          %v2143 = vadd.f32 %v2111, %v2112
          %v2144 = vadd.f32 %v2143, %v2113
          %v2145 = vadd.f32 %v2144, %v2114
          %v2146 = vadd.f32 %v2145, %v2115
          %v2147 = vadd.f32 %v2146, %v2116
          %v2148 = vadd.f32 %v2147, %v2117
          %v2149 = vadd.f32 %v2148, %v2118
          %v2150 = vadd.f32 %v2149, %v2119
          %v2151 = vadd.f32 %v2150, %v2120
          %v2152 = vadd.f32 %v2151, %v2121
          %v2153 = vadd.f32 %v2152, %v2122
          %v2154 = vadd.f32 %v2153, %v2123
          %v2155 = vadd.f32 %v2154, %v2124
          %v2156 = vadd.f32 %v2155, %v2125
          %v2157 = vadd.f32 %v2156, %v2126
          %v2158 = vadd.f32 %v2157, %v2127
          %v2159 = vadd.f32 %v2158, %v2128
          %v2160 = vadd.f32 %v2159, %v2129
          %v2161 = vadd.f32 %v2160, %v2130
          %v2162 = vadd.f32 %v2161, %v2131
          %v2163 = vadd.f32 %v2162, %v2132
          %v2164 = vadd.f32 %v2163, %v2133
          %v2165 = vadd.f32 %v2164, %v2134
          %v2166 = vadd.f32 %v2165, %v2135
          %v2167 = vadd.f32 %v2166, %v2136
          %v2168 = vadd.f32 %v2167, %v2137
          %v2169 = vadd.f32 %v2168, %v2138
          %v2170 = vadd.f32 %v2169, %v2139
          %v2171 = vadd.f32 %v2170, %v2140
          %v2172 = vadd.f32 %v2171, %v2141
          %v2173 = vadd.f32 %v2172, %v2142
          %v2174 = vrot.slane %v2173, 4
          %v2175 = vadd.f32 %v2173, %v2174
          %v2176 = vrot.slane %v2175, 2
          %v2177 = vadd.f32 %v2175, %v2176
          %v2178 = vrot.slane %v2177, 1
          %v2179 = vadd.f32 %v2177, %v2178
          %v2180 = vadd.f32 %v2110, %v2179
          %2181 = vst [vmem:[%s206] sm:$0x1] %v2180
        $region33: #{tpu_custom_call.1} parent=27 // loop_footer
          %s224 = sadd.s32 1, %s220
        $region34: #{tpu_custom_call.1} parent=27 // loop_footer_branch
          %219 = sbr.rel target = $region30
        $region35: #{tpu_custom_call.1} parent=27 // loop_exit
          _
        %s2182 = sand.u32 %s77, 1
        %s2183 = scalar_lea.sflag [#allocation3], %s2182
        %s2184 = sand.u32 %s77, 1
        %s2185 = smul.addr %s2184, 512
        %s2186 = scalar_lea.vmem [#allocation2], %s2185
        %s2187 = sand.u32 %s22, 1
        %s2188 = scalar_lea.sflag [#allocation5], %s2187
        %s2189 = sand.u32 %s103, 1
        %s2190 = scalar_lea.vmem [#allocation4], %s2189
        %s2191 = sand.u32 %s22, 1
        %s2192 = scalar_lea.sflag [#allocation5], %s2191
        %s2193 = sand.u32 %s129, 1
        %s2194 = scalar_lea.vmem [#allocation6], %s2193
        // Predicated region
        $region36: #{tpu_custom_call.1} parent=27 // pred_check
          %p2195 = pneg %p87
        $region37: #{tpu_custom_call.1} parent=27 // pred_check_branch
          %2197 = sbr.rel (%p2195) target = $region39
        $region38: #{tpu_custom_call.1} parent=27 // pred_region
          %2199 = vsyncadd %s2183, 0
          %s2200 = smul.addr %s22, 64
          %s2201 = smul.addr %s2200, 8
          %s2202 = scalar_lea.hbm %s2, %s2201
          %s2203 = sshll.u32 %s2186, 4
          %s2204 = int_to_ptr.vmem [resolvable:$true] %s2203
          %s2205 = sshll.u32 %s2202, 4
          %s2206 = int_to_ptr.hbm [resolvable:$true] %s2205
          %2211 = dma.vmem_to_hbm [thread:$0]  %s2204, 8192, %s2206, %s2183, 128, 128, 8
        $region39: #{tpu_custom_call.1} parent=27 // pred_fallthru
          _
        // Predicated region
        $region40: #{tpu_custom_call.1} parent=27 // pred_check
          %p2212 = pneg %p113
        $region41: #{tpu_custom_call.1} parent=27 // pred_check_branch
          %2214 = sbr.rel (%p2212) target = $region43
        $region42: #{tpu_custom_call.1} parent=27 // pred_region
          %2216 = vsyncadd %s2188, 0
          %s2217 = scalar_lea.hbm %s3, %s22
          %s2219 = sshll.u32 %s2190, 4
          %s2220 = int_to_ptr.vmem [resolvable:$true] %s2219
          %s2221 = sshll.u32 %s2217, 4
          %s2222 = int_to_ptr.hbm [resolvable:$true] %s2221
          %2224 = dma.vmem_to_hbm [thread:$0]  %s2220, 16, %s2222, %s2188
        $region43: #{tpu_custom_call.1} parent=27 // pred_fallthru
          _
        // Predicated region
        $region44: #{tpu_custom_call.1} parent=27 // pred_check
          %p2225 = pneg %p139
        $region45: #{tpu_custom_call.1} parent=27 // pred_check_branch
          %2227 = sbr.rel (%p2225) target = $region47
        $region46: #{tpu_custom_call.1} parent=27 // pred_region
          %2229 = vsyncadd %s2192, 0
          %s2230 = scalar_lea.hbm %s4, %s22
          %s2232 = sshll.u32 %s2194, 4
          %s2233 = int_to_ptr.vmem [resolvable:$true] %s2232
          %s2234 = sshll.u32 %s2230, 4
          %s2235 = int_to_ptr.hbm [resolvable:$true] %s2234
          %2237 = dma.vmem_to_hbm [thread:$0]  %s2233, 16, %s2235, %s2192
        $region47: #{tpu_custom_call.1} parent=27 // pred_fallthru
          _
      $region28: #{tpu_custom_call.1} parent=5 // pred_fallthru
        _
      %p2238 = scmp.le.s32.totalorder 2, %s17
      // Predicated region
      $region48: #{tpu_custom_call.1} parent=5 // pred_check
        %p2239 = pneg %p2238
      $region49: #{tpu_custom_call.1} parent=5 // pred_check_branch
        %2241 = sbr.rel (%p2239) target = $region51
      $region50: #{tpu_custom_call.1} parent=5 // pred_region
        %s2242 = ssub.s32 %s17, 2
        // Predicated region
        $region52: #{tpu_custom_call.1} parent=50 // pred_check
          %p2243 = pneg %p93
        $region53: #{tpu_custom_call.1} parent=50 // pred_check_branch
          %2245 = sbr.rel (%p2243) target = $region55
        $region54: #{tpu_custom_call.1} parent=50 // pred_region
          %s2246 = sand.u32 %s78, 1
          %s2247 = scalar_lea.sflag [#allocation3], %s2246
          %s2248 = sand.u32 %s78, 1
          %s2249 = smul.addr %s2248, 512
          %s2250 = scalar_lea.vmem [#allocation2], %s2249
          %2252 = dma.done %s2247, 8192
        $region55: #{tpu_custom_call.1} parent=50 // pred_fallthru
          _
        // Predicated region
        $region56: #{tpu_custom_call.1} parent=50 // pred_check
          %p2253 = pneg %p119
        $region57: #{tpu_custom_call.1} parent=50 // pred_check_branch
          %2255 = sbr.rel (%p2253) target = $region59
        $region58: #{tpu_custom_call.1} parent=50 // pred_region
          %s2256 = sand.u32 %s23, 1
          %s2257 = scalar_lea.sflag [#allocation5], %s2256
          %s2258 = sand.u32 %s104, 1
          %s2259 = scalar_lea.vmem [#allocation4], %s2258
          %2261 = dma.done %s2257, 16
        $region59: #{tpu_custom_call.1} parent=50 // pred_fallthru
          _
        // Predicated region
        $region60: #{tpu_custom_call.1} parent=50 // pred_check
          %p2262 = pneg %p145
        $region61: #{tpu_custom_call.1} parent=50 // pred_check_branch
          %2264 = sbr.rel (%p2262) target = $region63
        $region62: #{tpu_custom_call.1} parent=50 // pred_region
          %s2265 = sand.u32 %s23, 1
          %s2266 = scalar_lea.sflag [#allocation5], %s2265
          %s2267 = sand.u32 %s130, 1
          %s2268 = scalar_lea.vmem [#allocation6], %s2267
          %2270 = dma.done %s2266, 16
        $region63: #{tpu_custom_call.1} parent=50 // pred_fallthru
          _
      $region51: #{tpu_custom_call.1} parent=5 // pred_fallthru
        _
    $region6: #{tpu_custom_call.1} parent=1 // loop_footer
      %s21 = sadd.s32 1, %s17
    $region7: #{tpu_custom_call.1} parent=1 // loop_footer_branch
      %16 = sbr.rel target = $region3
    $region8: #{tpu_custom_call.1} parent=1 // loop_exit
      _
    %2271 = vsyncpa [#allocation3], 1
    %s2272 = scalar_lea.sflag [#allocation3], 1
    %2273 = vsyncpa %s2272, 1
    %2274 = vsyncpa [#allocation5], 1
    %s2275 = scalar_lea.sflag [#allocation5], 1
    %2276 = vsyncpa %s2275, 1

</llo_original>
